<compile_context>
chip_gen: v5e
topology: v5e:2x2
jax: 0.10.0
libtpu: 0.0.40
codegen_flags: <defaults>
</compile_context>

<pallas_src>
import functools

import jax
import jax.numpy as jnp
from jax.experimental import pallas as pl
from jax.experimental.pallas import tpu as pltpu


def qnetwork_kernel(state_ref, mask_ref,
                    w1_ref, b1_ref,
                    w2_ref, b2_ref,
                    w3_ref, b3_ref,
                    w4_ref, b4_ref,
                    masked_q_ref, probs_ref):
    # x: [TB, state_dim] f32 -> bf16 for the MXU, accumulate in f32.
    x = state_ref[...].astype(jnp.bfloat16)

    h1 = jnp.dot(x, w1_ref[...], preferred_element_type=jnp.float32) + b1_ref[...]
    h1 = jnp.maximum(h1, 0.0).astype(jnp.bfloat16)          # [TB, 128]

    h2 = jnp.dot(h1, w2_ref[...], preferred_element_type=jnp.float32) + b2_ref[...]
    h2 = jnp.maximum(h2, 0.0).astype(jnp.bfloat16)           # [TB, 512]

    h3 = jnp.dot(h2, w3_ref[...], preferred_element_type=jnp.float32) + b3_ref[...]
    h3 = jnp.maximum(h3, 0.0).astype(jnp.bfloat16)           # [TB, 512]

    q = jnp.dot(h3, w4_ref[...], preferred_element_type=jnp.float32) + b4_ref[...]

    # masked_fill(~open_mask.bool(), -inf); padded action lanes have mask==0.
    open_mask = mask_ref[...] != 0                            # [TB, A_pad]
    masked_q = jnp.where(open_mask, q, jnp.float32(-jnp.inf))
    masked_q_ref[...] = masked_q

    # softmax over last dim (matches torch.nn.functional.softmax semantics,
    # including NaN rows if every action is masked).
    m = jnp.max(masked_q, axis=-1, keepdims=True)
    e = jnp.exp(masked_q - m)
    denom = jnp.sum(e, axis=-1, keepdims=True)
    probs_ref[...] = e * pl.reciprocal(denom, approx=True)


def _round_up(x, m):
    return ((x + m - 1) // m) * m


@functools.partial(jax.jit, static_argnames=("block_b",))
def qnetwork_forward(state, open_mask, params, *, block_b=128):
    """state: [B, state_dim] f32, open_mask: [B, action_dim] int-like (0/1).

    Returns (masked_q, probs), each [B, action_dim] f32.
    """
    B, state_dim = state.shape
    action_dim = open_mask.shape[1]
    (w1, b1), (w2, b2), (w3, b3), (w4, b4) = params

    # ---- lane-dense outputs: pad action_dim to a multiple of 128 ----
    a_pad = _round_up(action_dim, 128)
    if a_pad != action_dim:
        w4 = jnp.pad(w4, ((0, 0), (0, a_pad - action_dim)))
        b4 = jnp.pad(b4, ((0, 0), (0, a_pad - action_dim)))
        open_mask = jnp.pad(open_mask, ((0, 0), (0, a_pad - action_dim)))
    open_mask = open_mask.astype(jnp.int32)

    # ---- batch tile: fill the MXU M dimension when B is large ----
    tb = min(block_b, _round_up(B, 8))
    b_pad = _round_up(B, tb)
    if b_pad != B:
        state = jnp.pad(state, ((0, b_pad - B), (0, 0)))
        open_mask = jnp.pad(open_mask, ((0, b_pad - B), (0, 0)))
    grid = (b_pad // tb,)

    h1, h2, h3 = w1.shape[1], w2.shape[1], w3.shape[1]

    # activations: tiled over the batch grid
    state_spec = pl.BlockSpec((tb, state_dim), lambda i: (i, 0))
    mask_spec = pl.BlockSpec((tb, a_pad), lambda i: (i, 0))
    out_spec = pl.BlockSpec((tb, a_pad), lambda i: (i, 0))
    # weights/biases: constant block index -> VMEM-resident across grid steps
    def const_spec(shape):
        return pl.BlockSpec(shape, lambda i: (0, 0))

    masked_q, probs = pl.pallas_call(
        qnetwork_kernel,
        out_shape=(
            jax.ShapeDtypeStruct((b_pad, a_pad), jnp.float32),  # masked_q
            jax.ShapeDtypeStruct((b_pad, a_pad), jnp.float32),  # probs
        ),
        grid=grid,
        in_specs=[
            state_spec,
            mask_spec,
            const_spec((state_dim, h1)), const_spec((1, h1)),
            const_spec((h1, h2)),        const_spec((1, h2)),
            const_spec((h2, h3)),        const_spec((1, h3)),
            const_spec((h3, a_pad)),     const_spec((1, a_pad)),
        ],
        out_specs=(out_spec, out_spec),
        compiler_params=pltpu.CompilerParams(
            dimension_semantics=("parallel",)),   # v7x: 2 TCs split the batch
    )(state, open_mask, w1, b1, w2, b2, w3, b3, w4, b4)

    return masked_q[:B, :action_dim], probs[:B, :action_dim]


def init_params(key, state_dim, action_dim):
    """Deterministic init matching PyTorch Linear shapes (weights stored as
    [in, out] = W.T in bfloat16, biases as [1, out] in float32)."""
    def linear(key, fan_in, fan_out):
        kw, kb = jax.random.split(key)
        bound = 1.0 / jnp.sqrt(jnp.float32(fan_in))
        w = jax.random.uniform(kw, (fan_in, fan_out), jnp.float32, -bound, bound)
        b = jax.random.uniform(kb, (1, fan_out), jnp.float32, -bound, bound)
        return w.astype(jnp.bfloat16), b

    k1, k2, k3, k4 = jax.random.split(key, 4)
    w1, b1 = linear(k1, state_dim, 128)   # fc1: Linear(state_dim, 128)
    w2, b2 = linear(k2, 256, 512)         # fc2: Linear(256, 512) as declared
    w3, b3 = linear(k3, 512, 512)         # fc3: Linear(512, 512)
    w4, b4 = linear(k4, 512, action_dim)  # fc4: Linear(512, action_dim)

    # Glue: slice fc2 to the 128 input features actually produced by fc1.
    w2 = w2[:128, :]
    return (w1, b1), (w2, b2), (w3, b3), (w4, b4)


def qnetwork_reference(state, open_mask, params):
    """Pure-JAX reference with the same bf16-weight / f32-accumulate recipe."""
    (w1, b1), (w2, b2), (w3, b3), (w4, b4) = params

    def lin(x, w, b):
        return jnp.dot(x.astype(jnp.bfloat16), w,
                       preferred_element_type=jnp.float32) + b

    h = jnp.maximum(lin(state, w1, b1), 0.0)
    h = jnp.maximum(lin(h, w2, b2), 0.0)
    h = jnp.maximum(lin(h, w3, b3), 0.0)
    q = lin(h, w4, b4)
    masked_q = jnp.where(open_mask != 0, q, jnp.float32(-jnp.inf))
    probs = jax.nn.softmax(masked_q, axis=-1)
    return masked_q, probs


if __name__ == "__main__":
    key = jax.random.PRNGKey(0)
    k_state, k_mask, k_params = jax.random.split(key, 3)

    B = 8
    state_dim = 32
    action_dim = 16

    state = jax.random.normal(k_state, (B, state_dim), jnp.float32)
    # 0/1 open-mask; force action 0 open so no row is fully masked.
    open_mask = jax.random.bernoulli(k_mask, 0.6, (B, action_dim)).astype(jnp.int32)
    open_mask = open_mask.at[:, 0].set(1)

    params = init_params(k_params, state_dim, action_dim)

    masked_q, probs = qnetwork_forward(state, open_mask, params)
    jax.block_until_ready((masked_q, probs))

    assert masked_q.shape == (B, action_dim)
    assert probs.shape == (B, action_dim)

    # Loose correctness check vs. pure-JAX reference (approx reciprocal +
    # bf16 matmuls => generous tolerances).
    ref_q, ref_p = qnetwork_reference(state, open_mask, params)
    finite = jnp.isfinite(ref_q)
    assert bool(jnp.all(finite == jnp.isfinite(masked_q)))
    assert bool(jnp.allclose(jnp.where(finite, masked_q, 0.0),
                             jnp.where(finite, ref_q, 0.0),
                             rtol=2e-2, atol=2e-2))
    assert bool(jnp.allclose(probs, ref_p, atol=1e-2))
    assert bool(jnp.allclose(jnp.sum(probs, axis=-1), 1.0, atol=1e-2))

    print("KERNEL_OK")
</pallas_src>

<mosaic_0001>
module attributes {stable_mosaic.version = 11 : i64} {
  func.func @qnetwork_kernel(%arg0: i32, %arg1: memref<8x32xf32, #tpu.memory_space<vmem>>, %arg2: memref<8x128xi32, #tpu.memory_space<vmem>>, %arg3: memref<32x128xbf16, #tpu.memory_space<vmem>>, %arg4: memref<1x128xf32, #tpu.memory_space<vmem>>, %arg5: memref<128x512xbf16, #tpu.memory_space<vmem>>, %arg6: memref<1x512xf32, #tpu.memory_space<vmem>>, %arg7: memref<512x512xbf16, #tpu.memory_space<vmem>>, %arg8: memref<1x512xf32, #tpu.memory_space<vmem>>, %arg9: memref<512x128xbf16, #tpu.memory_space<vmem>>, %arg10: memref<1x128xf32, #tpu.memory_space<vmem>>, %arg11: memref<8x128xf32, #tpu.memory_space<vmem>>, %arg12: memref<8x128xf32, #tpu.memory_space<vmem>>) attributes {dimension_semantics = [#tpu.dimension_semantics<parallel>], iteration_bounds = array<i64: 1>, scalar_prefetch = 0 : i64, scratch_operands = 0 : i64, tpu.core_type = #tpu.core_type<tc>, window_params = [{transform_indices = @transform_0, window_bounds = array<i64: 8, 32>}, {transform_indices = @transform_1, window_bounds = array<i64: 8, 128>}, {pipeline_mode = #tpu.pipeline_mode<synchronous>, transform_indices = @transform_2, window_bounds = array<i64: 32, 128>}, {pipeline_mode = #tpu.pipeline_mode<synchronous>, transform_indices = @transform_3, window_bounds = array<i64: 1, 128>}, {pipeline_mode = #tpu.pipeline_mode<synchronous>, transform_indices = @transform_4, window_bounds = array<i64: 128, 512>}, {pipeline_mode = #tpu.pipeline_mode<synchronous>, transform_indices = @transform_5, window_bounds = array<i64: 1, 512>}, {pipeline_mode = #tpu.pipeline_mode<synchronous>, transform_indices = @transform_6, window_bounds = array<i64: 512, 512>}, {pipeline_mode = #tpu.pipeline_mode<synchronous>, transform_indices = @transform_7, window_bounds = array<i64: 1, 512>}, {pipeline_mode = #tpu.pipeline_mode<synchronous>, transform_indices = @transform_8, window_bounds = array<i64: 512, 128>}, {pipeline_mode = #tpu.pipeline_mode<synchronous>, transform_indices = @transform_9, window_bounds = array<i64: 1, 128>}, {transform_indices = @transform_10, window_bounds = array<i64: 8, 128>}, {transform_indices = @transform_11, window_bounds = array<i64: 8, 128>}]} {
    %c0 = arith.constant 0 : index
    %c0_0 = arith.constant 0 : index
    %0 = vector.load %arg1[%c0, %c0_0] : memref<8x32xf32, #tpu.memory_space<vmem>>, vector<8x32xf32>
    %1 = arith.truncf %0 : vector<8x32xf32> to vector<8x32xbf16>
    %c0_1 = arith.constant 0 : index
    %c0_2 = arith.constant 0 : index
    %2 = vector.load %arg3[%c0_1, %c0_2] : memref<32x128xbf16, #tpu.memory_space<vmem>>, vector<32x128xbf16>
    %cst = arith.constant dense<0.000000e+00> : vector<8x128xf32>
    %3 = tpu.matmul %1, %2, %cst {dimension_numbers = #tpu.dot_dimension_numbers<[1], [0], [0], [1], [0, 0, 1, 1], [], []>} : vector<8x32xbf16>, vector<32x128xbf16>, vector<8x128xf32> -> vector<8x128xf32>
    %c0_3 = arith.constant 0 : index
    %c0_4 = arith.constant 0 : index
    %4 = vector.load %arg4[%c0_3, %c0_4] : memref<1x128xf32, #tpu.memory_space<vmem>>, vector<1x128xf32>
    %5 = vector.broadcast %4 : vector<1x128xf32> to vector<8x128xf32>
    %6 = arith.addf %3, %5 : vector<8x128xf32>
    %cst_5 = arith.constant 0.000000e+00 : f32
    %7 = vector.broadcast %cst_5 : f32 to vector<8x128xf32>
    %8 = arith.maximumf %6, %7 : vector<8x128xf32>
    %9 = arith.truncf %8 : vector<8x128xf32> to vector<8x128xbf16>
    %c0_6 = arith.constant 0 : index
    %c0_7 = arith.constant 0 : index
    %10 = vector.load %arg5[%c0_6, %c0_7] : memref<128x512xbf16, #tpu.memory_space<vmem>>, vector<128x512xbf16>
    %cst_8 = arith.constant dense<0.000000e+00> : vector<8x512xf32>
    %11 = tpu.matmul %9, %10, %cst_8 {dimension_numbers = #tpu.dot_dimension_numbers<[1], [0], [0], [1], [0, 0, 1, 1], [], []>} : vector<8x128xbf16>, vector<128x512xbf16>, vector<8x512xf32> -> vector<8x512xf32>
    %c0_9 = arith.constant 0 : index
    %c0_10 = arith.constant 0 : index
    %12 = vector.load %arg6[%c0_9, %c0_10] : memref<1x512xf32, #tpu.memory_space<vmem>>, vector<1x512xf32>
    %13 = vector.broadcast %12 : vector<1x512xf32> to vector<8x512xf32>
    %14 = arith.addf %11, %13 : vector<8x512xf32>
    %cst_11 = arith.constant 0.000000e+00 : f32
    %15 = vector.broadcast %cst_11 : f32 to vector<8x512xf32>
    %16 = arith.maximumf %14, %15 : vector<8x512xf32>
    %17 = arith.truncf %16 : vector<8x512xf32> to vector<8x512xbf16>
    %c0_12 = arith.constant 0 : index
    %c0_13 = arith.constant 0 : index
    %18 = vector.load %arg7[%c0_12, %c0_13] : memref<512x512xbf16, #tpu.memory_space<vmem>>, vector<512x512xbf16>
    %cst_14 = arith.constant dense<0.000000e+00> : vector<8x512xf32>
    %19 = tpu.matmul %17, %18, %cst_14 {dimension_numbers = #tpu.dot_dimension_numbers<[1], [0], [0], [1], [0, 0, 1, 1], [], []>} : vector<8x512xbf16>, vector<512x512xbf16>, vector<8x512xf32> -> vector<8x512xf32>
    %c0_15 = arith.constant 0 : index
    %c0_16 = arith.constant 0 : index
    %20 = vector.load %arg8[%c0_15, %c0_16] : memref<1x512xf32, #tpu.memory_space<vmem>>, vector<1x512xf32>
    %21 = vector.broadcast %20 : vector<1x512xf32> to vector<8x512xf32>
    %22 = arith.addf %19, %21 : vector<8x512xf32>
    %cst_17 = arith.constant 0.000000e+00 : f32
    %23 = vector.broadcast %cst_17 : f32 to vector<8x512xf32>
    %24 = arith.maximumf %22, %23 : vector<8x512xf32>
    %25 = arith.truncf %24 : vector<8x512xf32> to vector<8x512xbf16>
    %c0_18 = arith.constant 0 : index
    %c0_19 = arith.constant 0 : index
    %26 = vector.load %arg9[%c0_18, %c0_19] : memref<512x128xbf16, #tpu.memory_space<vmem>>, vector<512x128xbf16>
    %cst_20 = arith.constant dense<0.000000e+00> : vector<8x128xf32>
    %27 = tpu.matmul %25, %26, %cst_20 {dimension_numbers = #tpu.dot_dimension_numbers<[1], [0], [0], [1], [0, 0, 1, 1], [], []>} : vector<8x512xbf16>, vector<512x128xbf16>, vector<8x128xf32> -> vector<8x128xf32>
    %c0_21 = arith.constant 0 : index
    %c0_22 = arith.constant 0 : index
    %28 = vector.load %arg10[%c0_21, %c0_22] : memref<1x128xf32, #tpu.memory_space<vmem>>, vector<1x128xf32>
    %29 = vector.broadcast %28 : vector<1x128xf32> to vector<8x128xf32>
    %30 = arith.addf %27, %29 : vector<8x128xf32>
    %c0_23 = arith.constant 0 : index
    %c0_24 = arith.constant 0 : index
    %31 = vector.load %arg2[%c0_23, %c0_24] : memref<8x128xi32, #tpu.memory_space<vmem>>, vector<8x128xi32>
    %c0_i32 = arith.constant 0 : i32
    %32 = vector.broadcast %c0_i32 : i32 to vector<8x128xi32>
    %33 = arith.cmpi ne, %31, %32 : vector<8x128xi32>
    %cst_25 = arith.constant 0xFF800000 : f32
    %34 = vector.broadcast %cst_25 : f32 to vector<8x128xf32>
    %35 = arith.select %33, %30, %34 : vector<8x128xi1>, vector<8x128xf32>
    %c0_26 = arith.constant 0 : index
    %c0_27 = arith.constant 0 : index
    %36 = vector.load %arg11[%c0_26, %c0_27] : memref<8x128xf32, #tpu.memory_space<vmem>>, vector<8x128xf32>
    tpu.vector_store %arg11[%c0_26, %c0_27], %35 {strides = array<i32>} : memref<8x128xf32, #tpu.memory_space<vmem>>, vector<8x128xf32>,
    %cst_28 = arith.constant dense<0xFF800000> : vector<8xf32>
    %37 = vector.multi_reduction <maximumf>, %35, %cst_28 [1] : vector<8x128xf32> to vector<8xf32>
    %38 = vector.shape_cast %37 : vector<8xf32> to vector<8x1xf32>
    %39 = vector.broadcast %38 : vector<8x1xf32> to vector<8x128xf32>
    %40 = arith.subf %35, %39 : vector<8x128xf32>
    %41 = math.exp %40 : vector<8x128xf32>
    %cst_29 = arith.constant dense<0.000000e+00> : vector<8xf32>
    %42 = vector.multi_reduction <add>, %41, %cst_29 [1] : vector<8x128xf32> to vector<8xf32>
    %43 = vector.shape_cast %42 : vector<8xf32> to vector<8x1xf32>
    %44 = tpu.reciprocal %43 {approx = true} : vector<8x1xf32> -> vector<8x1xf32>
    %45 = vector.broadcast %44 : vector<8x1xf32> to vector<8x128xf32>
    %46 = arith.mulf %41, %45 : vector<8x128xf32>
    %c0_30 = arith.constant 0 : index
    %c0_31 = arith.constant 0 : index
    %47 = vector.load %arg12[%c0_30, %c0_31] : memref<8x128xf32, #tpu.memory_space<vmem>>, vector<8x128xf32>
    tpu.vector_store %arg12[%c0_30, %c0_31], %46 {strides = array<i32>} : memref<8x128xf32, #tpu.memory_space<vmem>>, vector<8x128xf32>,
    return
  }
  func.func @transform_0(%arg0: i32) -> (i32, i32) {
    %c0_i32 = arith.constant 0 : i32
    %c0_i32_0 = arith.constant 0 : i32
    return %arg0, %c0_i32 : i32, i32
  }
  func.func @transform_1(%arg0: i32) -> (i32, i32) {
    %c0_i32 = arith.constant 0 : i32
    %c0_i32_0 = arith.constant 0 : i32
    return %arg0, %c0_i32 : i32, i32
  }
  func.func @transform_2(%arg0: i32) -> (i32, i32) {
    %c0_i32 = arith.constant 0 : i32
    %c0_i32_0 = arith.constant 0 : i32
    %c0_i32_1 = arith.constant 0 : i32
    return %c0_i32, %c0_i32_0 : i32, i32
  }
  func.func @transform_3(%arg0: i32) -> (i32, i32) {
    %c0_i32 = arith.constant 0 : i32
    %c0_i32_0 = arith.constant 0 : i32
    %c0_i32_1 = arith.constant 0 : i32
    return %c0_i32, %c0_i32_0 : i32, i32
  }
  func.func @transform_4(%arg0: i32) -> (i32, i32) {
    %c0_i32 = arith.constant 0 : i32
    %c0_i32_0 = arith.constant 0 : i32
    %c0_i32_1 = arith.constant 0 : i32
    return %c0_i32, %c0_i32_0 : i32, i32
  }
  func.func @transform_5(%arg0: i32) -> (i32, i32) {
    %c0_i32 = arith.constant 0 : i32
    %c0_i32_0 = arith.constant 0 : i32
    %c0_i32_1 = arith.constant 0 : i32
    return %c0_i32, %c0_i32_0 : i32, i32
  }
  func.func @transform_6(%arg0: i32) -> (i32, i32) {
    %c0_i32 = arith.constant 0 : i32
    %c0_i32_0 = arith.constant 0 : i32
    %c0_i32_1 = arith.constant 0 : i32
    return %c0_i32, %c0_i32_0 : i32, i32
  }
  func.func @transform_7(%arg0: i32) -> (i32, i32) {
    %c0_i32 = arith.constant 0 : i32
    %c0_i32_0 = arith.constant 0 : i32
    %c0_i32_1 = arith.constant 0 : i32
    return %c0_i32, %c0_i32_0 : i32, i32
  }
  func.func @transform_8(%arg0: i32) -> (i32, i32) {
    %c0_i32 = arith.constant 0 : i32
    %c0_i32_0 = arith.constant 0 : i32
    %c0_i32_1 = arith.constant 0 : i32
    return %c0_i32, %c0_i32_0 : i32, i32
  }
  func.func @transform_9(%arg0: i32) -> (i32, i32) {
    %c0_i32 = arith.constant 0 : i32
    %c0_i32_0 = arith.constant 0 : i32
    %c0_i32_1 = arith.constant 0 : i32
    return %c0_i32, %c0_i32_0 : i32, i32
  }
  func.func @transform_10(%arg0: i32) -> (i32, i32) {
    %c0_i32 = arith.constant 0 : i32
    %c0_i32_0 = arith.constant 0 : i32
    return %arg0, %c0_i32 : i32, i32
  }
  func.func @transform_11(%arg0: i32) -> (i32, i32) {
    %c0_i32 = arith.constant 0 : i32
    %c0_i32_0 = arith.constant 0 : i32
    return %arg0, %c0_i32 : i32, i32
  }
}

</mosaic_0001>

<llo_original>
// kernel: qnetwork_forward.1
$region0: #{qnetwork_forward.1}
  #allocation0 [shape = 'u32[]', space=smem, size = 0x4, offset = 0x4, fixed_abs, tag = 'smem constant byte address 0x4 - core index']
  #allocation1 [shape = 'u32[72,128]{1,0:T(1,128)}', space=vmem, size = 0x9000, scoped, tag = 'internal scratch']
  %s0 = inlined_call_operand.vmem [shape: f32[8,32], index: 0, kind: input, shape index: {}]
  %s1 = inlined_call_operand.vmem [shape: s32[8,128], index: 1, kind: input, shape index: {}]
  %s2 = inlined_call_operand.vmem [shape: bf16[32,128], index: 2, kind: input, shape index: {}]
  %s3 = inlined_call_operand.vmem [shape: f32[1,128], index: 3, kind: input, shape index: {}]
  %s4 = inlined_call_operand.vmem [shape: bf16[128,512], index: 4, kind: input, shape index: {}]
  %s5 = inlined_call_operand.vmem [shape: f32[1,512], index: 5, kind: input, shape index: {}]
  %s6 = inlined_call_operand.hbm [shape: bf16[512,512], index: 6, kind: input, shape index: {}]
  %s7 = inlined_call_operand.vmem [shape: f32[1,512], index: 7, kind: input, shape index: {}]
  %s8 = inlined_call_operand.vmem [shape: bf16[512,128], index: 8, kind: input, shape index: {}]
  %s9 = inlined_call_operand.vmem [shape: f32[1,128], index: 9, kind: input, shape index: {}]
  %s10 = inlined_call_operand.hbm [shape: f32[8,128], index: 10, kind: output, shape index: {0}]
  %s11 = inlined_call_operand.hbm [shape: f32[8,128], index: 11, kind: output, shape index: {1}]
  %12 = xla_tuple %s10, %s11
  %s13 = sld [smem:[#allocation0]]
  $region62: #{qnetwork_forward.1} parent=0
    _
  %s15 = ssub.s32 1, %s13
  %s16 = scalar_select 0, %s15, %s13
  $region1: #{qnetwork_forward.1} parent=0
    #allocation2 [shape = 'u8[524288]{0}', space=vmem, size = 0x80000, scoped, tag = 'input window, operand 6, single buffered']
    #allocation3 [shape = 's32[1]{0}', space=sflag, size = 0x4, scoped, tag = 'scoped memory for qnetwork_forward.1']
    #allocation4 [shape = 's32[1]{0}', space=sflag, size = 0x4, scoped, tag = 'scoped memory for qnetwork_forward.1']
    #allocation5 [shape = 'u8[4096]{0}', space=vmem, size = 0x1000, scoped, tag = 'output window, operand 0, single buffered']
    #allocation6 [shape = 'u8[4096]{0}', space=vmem, size = 0x1000, scoped, tag = 'output window, operand 1, single buffered']
    #allocation7 [shape = 's32[1]{0}', space=sflag, size = 0x4, scoped, tag = 'scoped memory for qnetwork_forward.1']
    %17 = vsyncpa [#allocation3], 0
    %18 = vsyncpa [#allocation4], 0
    %19 = vsyncpa [#allocation7], 0
    // Predicated region
    $region2: #{qnetwork_forward.1} parent=1 // pred_check
      _
    $region3: #{qnetwork_forward.1} parent=1 // pred_check_branch
      %21 = sbr.rel (0) target = $region5
    $region4: #{qnetwork_forward.1} parent=1 // pred_region
      _
    $region5: #{qnetwork_forward.1} parent=1 // pred_fallthru
      _
    // Predicated region
    $region6: #{qnetwork_forward.1} parent=1 // pred_check
      _
    $region7: #{qnetwork_forward.1} parent=1 // pred_check_branch
      %23 = sbr.rel (0) target = $region9
    $region8: #{qnetwork_forward.1} parent=1 // pred_region
      _
    $region9: #{qnetwork_forward.1} parent=1 // pred_fallthru
      _
    // Predicated region
    $region10: #{qnetwork_forward.1} parent=1 // pred_check
      _
    $region11: #{qnetwork_forward.1} parent=1 // pred_check_branch
      %25 = sbr.rel (0) target = $region13
    $region12: #{qnetwork_forward.1} parent=1 // pred_region
      _
    $region13: #{qnetwork_forward.1} parent=1 // pred_fallthru
      _
    // Predicated region
    $region14: #{qnetwork_forward.1} parent=1 // pred_check
      _
    $region15: #{qnetwork_forward.1} parent=1 // pred_check_branch
      %27 = sbr.rel (0) target = $region17
    $region16: #{qnetwork_forward.1} parent=1 // pred_region
      _
    $region17: #{qnetwork_forward.1} parent=1 // pred_fallthru
      _
    // Predicated region
    $region18: #{qnetwork_forward.1} parent=1 // pred_check
      _
    $region19: #{qnetwork_forward.1} parent=1 // pred_check_branch
      %29 = sbr.rel (0) target = $region21
    $region20: #{qnetwork_forward.1} parent=1 // pred_region
      _
    $region21: #{qnetwork_forward.1} parent=1 // pred_fallthru
      _
    // Predicated region
    $region22: #{qnetwork_forward.1} parent=1 // pred_check
      _
    $region23: #{qnetwork_forward.1} parent=1 // pred_check_branch
      %31 = sbr.rel (0) target = $region25
    $region24: #{qnetwork_forward.1} parent=1 // pred_region
      _
    $region25: #{qnetwork_forward.1} parent=1 // pred_fallthru
      _
    // Predicated region
    $region26: #{qnetwork_forward.1} parent=1 // pred_check
      _
    $region27: #{qnetwork_forward.1} parent=1 // pred_check_branch
      %33 = sbr.rel (0) target = $region29
    $region28: #{qnetwork_forward.1} parent=1 // pred_region
      %35 = vsyncadd [#allocation3], 0
      %s36 = sshll.u32 %s6, 4
      %s37 = int_to_ptr.hbm [resolvable:$true] %s36
      %s38 = sshll.u32 [#allocation2], 4
      %s39 = int_to_ptr.vmem [resolvable:$true] %s38
      %44 = dma.hbm_to_vmem [thread:$0]  %s37, 16384, %s39, [#allocation3], 256, 256, 16
    $region29: #{qnetwork_forward.1} parent=1 // pred_fallthru
      _
    // Predicated region
    $region30: #{qnetwork_forward.1} parent=1 // pred_check
      _
    $region31: #{qnetwork_forward.1} parent=1 // pred_check_branch
      %46 = sbr.rel (0) target = $region33
    $region32: #{qnetwork_forward.1} parent=1 // pred_region
      _
    $region33: #{qnetwork_forward.1} parent=1 // pred_fallthru
      _
    // Predicated region
    $region34: #{qnetwork_forward.1} parent=1 // pred_check
      _
    $region35: #{qnetwork_forward.1} parent=1 // pred_check_branch
      %48 = sbr.rel (0) target = $region37
    $region36: #{qnetwork_forward.1} parent=1 // pred_region
      _
    $region37: #{qnetwork_forward.1} parent=1 // pred_fallthru
      _
    // Predicated region
    $region38: #{qnetwork_forward.1} parent=1 // pred_check
      _
    $region39: #{qnetwork_forward.1} parent=1 // pred_check_branch
      %50 = sbr.rel (0) target = $region41
    $region40: #{qnetwork_forward.1} parent=1 // pred_region
      _
    $region41: #{qnetwork_forward.1} parent=1 // pred_fallthru
      _
    // Predicated region
    $region42: #{qnetwork_forward.1} parent=1 // pred_check
      _
    $region43: #{qnetwork_forward.1} parent=1 // pred_check_branch
      %52 = sbr.rel (0) target = $region45
    $region44: #{qnetwork_forward.1} parent=1 // pred_region
      %54 = dma.done [#allocation3], 16384
    $region45: #{qnetwork_forward.1} parent=1 // pred_fallthru
      _
    %v56 = vld [vmem:[%s0] sm:$0xff]
    %v57 = vpack.c.bf16 %v56, %v56
    %v58 = vld [vmem:[%s2] sm:$0xf]
    %v59 = vld [vmem:[%s2 + $0x4] sm:$0xf]
    %v60 = vld [vmem:[%s2 + $0x8] sm:$0xf]
    %v61 = vld [vmem:[%s2 + $0xc] sm:$0xf]
    %v62 = vld [vmem:[%s3] sm:$0x1]
    %v64 = vperm.slane %v62, 0
    %v70 = vunpack.c.l.b16 %v58
    %v71 = vunpack.c.l.b16 %v59
    %v72 = vunpack.c.l.b16 %v60
    %v73 = vunpack.c.l.b16 %v61
    %v74 = vpack.c.b16 %v71, %v70
    %v75 = vpack.c.b16 %v73, %v72
    %vm78 = vcmask 261120
    %v80 = vsel %vm78, %v57, 0
    %82 = vmatpush.bf16.msra.mxu0 0
    %83 = vmatpush.bf16.msra.mxu0 0
    %84 = vmatpush.bf16.msra.mxu0 0
    %85 = vmatpush.bf16.msra.mxu0 0
    %86 = vmatpush.bf16.msra.mxu0 0
    %87 = vmatpush.bf16.msra.mxu0 0
    %88 = vmatpush.bf16.msra.mxu0 %v75
    %89 = vmatpush.bf16.msra.mxu0 %v74
    %90 = vmatmul.bf16.gmra.mxu0 %v80
    %v91 = vpop.f32.mrf.mxu0
    %v92 = vadd.f32 %v64, %v91
    %v93 = vpop.f32.mrf.mxu0
    %94 = vdwg.mxu0
    %v95 = vmax.f32 %v92, 0.0
    %v96 = vpack.c.bf16 %v95, %v95
    %v97 = vld [vmem:[%s4] sm:$0xff]
    %v98 = vld [vmem:[%s4 + $0x8] sm:$0xff]
    %v99 = vld [vmem:[%s4 + $0x10] sm:$0xff]
    %v100 = vld [vmem:[%s4 + $0x18] sm:$0xff]
    %v101 = vld [vmem:[%s4 + $0x20] sm:$0xff]
    %v102 = vld [vmem:[%s4 + $0x28] sm:$0xff]
    %v103 = vld [vmem:[%s4 + $0x30] sm:$0xff]
    %v104 = vld [vmem:[%s4 + $0x38] sm:$0xff]
    %v105 = vld [vmem:[%s4 + $0x40] sm:$0xff]
    %v106 = vld [vmem:[%s4 + $0x48] sm:$0xff]
    %v107 = vld [vmem:[%s4 + $0x50] sm:$0xff]
    %v108 = vld [vmem:[%s4 + $0x58] sm:$0xff]
    %v109 = vld [vmem:[%s4 + $0x60] sm:$0xff]
    %v110 = vld [vmem:[%s4 + $0x68] sm:$0xff]
    %v111 = vld [vmem:[%s4 + $0x70] sm:$0xff]
    %v112 = vld [vmem:[%s4 + $0x78] sm:$0xff]
    %v113 = vld [vmem:[%s4 + $0x80] sm:$0xff]
    %v114 = vld [vmem:[%s4 + $0x88] sm:$0xff]
    %v115 = vld [vmem:[%s4 + $0x90] sm:$0xff]
    %v116 = vld [vmem:[%s4 + $0x98] sm:$0xff]
    %v117 = vld [vmem:[%s4 + $0xa0] sm:$0xff]
    %v118 = vld [vmem:[%s4 + $0xa8] sm:$0xff]
    %v119 = vld [vmem:[%s4 + $0xb0] sm:$0xff]
    %v120 = vld [vmem:[%s4 + $0xb8] sm:$0xff]
    %v121 = vld [vmem:[%s4 + $0xc0] sm:$0xff]
    %v122 = vld [vmem:[%s4 + $0xc8] sm:$0xff]
    %v123 = vld [vmem:[%s4 + $0xd0] sm:$0xff]
    %v124 = vld [vmem:[%s4 + $0xd8] sm:$0xff]
    %v125 = vld [vmem:[%s4 + $0xe0] sm:$0xff]
    %v126 = vld [vmem:[%s4 + $0xe8] sm:$0xff]
    %v127 = vld [vmem:[%s4 + $0xf0] sm:$0xff]
    %v128 = vld [vmem:[%s4 + $0xf8] sm:$0xff]
    %v129 = vld [vmem:[%s5] sm:$0xf]
    %v131 = vperm.slane %v129, 0
    %v132 = vperm.slane %v129, 1
    %v133 = vperm.slane %v129, 2
    %v134 = vperm.slane %v129, 3
    %v171 = vunpack.c.l.b16 %v97
    %v172 = vunpack.c.h.b16 %v97
    %v173 = vunpack.c.l.b16 %v98
    %v174 = vunpack.c.h.b16 %v98
    %v175 = vunpack.c.l.b16 %v99
    %v176 = vunpack.c.h.b16 %v99
    %v177 = vunpack.c.l.b16 %v100
    %v178 = vunpack.c.h.b16 %v100
    %v179 = vunpack.c.l.b16 %v101
    %v180 = vunpack.c.h.b16 %v101
    %v181 = vunpack.c.l.b16 %v102
    %v182 = vunpack.c.h.b16 %v102
    %v183 = vunpack.c.l.b16 %v103
    %v184 = vunpack.c.h.b16 %v103
    %v185 = vunpack.c.l.b16 %v104
    %v186 = vunpack.c.h.b16 %v104
    %v187 = vunpack.c.l.b16 %v105
    %v188 = vunpack.c.h.b16 %v105
    %v189 = vunpack.c.l.b16 %v106
    %v190 = vunpack.c.h.b16 %v106
    %v191 = vunpack.c.l.b16 %v107
    %v192 = vunpack.c.h.b16 %v107
    %v193 = vunpack.c.l.b16 %v108
    %v194 = vunpack.c.h.b16 %v108
    %v195 = vunpack.c.l.b16 %v109
    %v196 = vunpack.c.h.b16 %v109
    %v197 = vunpack.c.l.b16 %v110
    %v198 = vunpack.c.h.b16 %v110
    %v199 = vunpack.c.l.b16 %v111
    %v200 = vunpack.c.h.b16 %v111
    %v201 = vunpack.c.l.b16 %v112
    %v202 = vunpack.c.h.b16 %v112
    %v203 = vunpack.c.l.b16 %v113
    %v204 = vunpack.c.h.b16 %v113
    %v205 = vunpack.c.l.b16 %v114
    %v206 = vunpack.c.h.b16 %v114
    %v207 = vunpack.c.l.b16 %v115
    %v208 = vunpack.c.h.b16 %v115
    %v209 = vunpack.c.l.b16 %v116
    %v210 = vunpack.c.h.b16 %v116
    %v211 = vunpack.c.l.b16 %v117
    %v212 = vunpack.c.h.b16 %v117
    %v213 = vunpack.c.l.b16 %v118
    %v214 = vunpack.c.h.b16 %v118
    %v215 = vunpack.c.l.b16 %v119
    %v216 = vunpack.c.h.b16 %v119
    %v217 = vunpack.c.l.b16 %v120
    %v218 = vunpack.c.h.b16 %v120
    %v219 = vunpack.c.l.b16 %v121
    %v220 = vunpack.c.h.b16 %v121
    %v221 = vunpack.c.l.b16 %v122
    %v222 = vunpack.c.h.b16 %v122
    %v223 = vunpack.c.l.b16 %v123
    %v224 = vunpack.c.h.b16 %v123
    %v225 = vunpack.c.l.b16 %v124
    %v226 = vunpack.c.h.b16 %v124
    %v227 = vunpack.c.l.b16 %v125
    %v228 = vunpack.c.h.b16 %v125
    %v229 = vunpack.c.l.b16 %v126
    %v230 = vunpack.c.h.b16 %v126
    %v231 = vunpack.c.l.b16 %v127
    %v232 = vunpack.c.h.b16 %v127
    %v233 = vunpack.c.l.b16 %v128
    %v234 = vunpack.c.h.b16 %v128
    %v235 = vpack.c.b16 %v175, %v171
    %v236 = vpack.c.b16 %v176, %v172
    %v237 = vpack.c.b16 %v177, %v173
    %v238 = vpack.c.b16 %v178, %v174
    %v239 = vpack.c.b16 %v183, %v179
    %v240 = vpack.c.b16 %v184, %v180
    %v241 = vpack.c.b16 %v185, %v181
    %v242 = vpack.c.b16 %v186, %v182
    %v243 = vpack.c.b16 %v191, %v187
    %v244 = vpack.c.b16 %v192, %v188
    %v245 = vpack.c.b16 %v193, %v189
    %v246 = vpack.c.b16 %v194, %v190
    %v247 = vpack.c.b16 %v199, %v195
    %v248 = vpack.c.b16 %v200, %v196
    %v249 = vpack.c.b16 %v201, %v197
    %v250 = vpack.c.b16 %v202, %v198
    %v251 = vpack.c.b16 %v207, %v203
    %v252 = vpack.c.b16 %v208, %v204
    %v253 = vpack.c.b16 %v209, %v205
    %v254 = vpack.c.b16 %v210, %v206
    %v255 = vpack.c.b16 %v215, %v211
    %v256 = vpack.c.b16 %v216, %v212
    %v257 = vpack.c.b16 %v217, %v213
    %v258 = vpack.c.b16 %v218, %v214
    %v259 = vpack.c.b16 %v223, %v219
    %v260 = vpack.c.b16 %v224, %v220
    %v261 = vpack.c.b16 %v225, %v221
    %v262 = vpack.c.b16 %v226, %v222
    %v263 = vpack.c.b16 %v231, %v227
    %v264 = vpack.c.b16 %v232, %v228
    %v265 = vpack.c.b16 %v233, %v229
    %v266 = vpack.c.b16 %v234, %v230
    %299 = vmatpush.bf16.msra.mxu0 %v263
    %300 = vmatpush.bf16.msra.mxu0 %v259
    %301 = vmatpush.bf16.msra.mxu0 %v255
    %302 = vmatpush.bf16.msra.mxu0 %v251
    %303 = vmatpush.bf16.msra.mxu0 %v247
    %304 = vmatpush.bf16.msra.mxu0 %v243
    %305 = vmatpush.bf16.msra.mxu0 %v239
    %306 = vmatpush.bf16.msra.mxu0 %v235
    %307 = vmatmul.bf16.gmra.mxu0 %v96
    %v308 = vpop.f32.mrf.mxu0
    %v309 = vadd.f32 %v131, %v308
    %v310 = vpop.f32.mrf.mxu0
    %311 = vdwg.mxu0
    %312 = vmatpush.bf16.msra.mxu0 %v264
    %313 = vmatpush.bf16.msra.mxu0 %v260
    %314 = vmatpush.bf16.msra.mxu0 %v256
    %315 = vmatpush.bf16.msra.mxu0 %v252
    %316 = vmatpush.bf16.msra.mxu0 %v248
    %317 = vmatpush.bf16.msra.mxu0 %v244
    %318 = vmatpush.bf16.msra.mxu0 %v240
    %319 = vmatpush.bf16.msra.mxu0 %v236
    %320 = vmatmul.bf16.gmra.mxu0 %v96
    %v321 = vpop.f32.mrf.mxu0
    %v322 = vadd.f32 %v132, %v321
    %v323 = vpop.f32.mrf.mxu0
    %324 = vdwg.mxu0
    %325 = vmatpush.bf16.msra.mxu0 %v265
    %326 = vmatpush.bf16.msra.mxu0 %v261
    %327 = vmatpush.bf16.msra.mxu0 %v257
    %328 = vmatpush.bf16.msra.mxu0 %v253
    %329 = vmatpush.bf16.msra.mxu0 %v249
    %330 = vmatpush.bf16.msra.mxu0 %v245
    %331 = vmatpush.bf16.msra.mxu0 %v241
    %332 = vmatpush.bf16.msra.mxu0 %v237
    %333 = vmatmul.bf16.gmra.mxu0 %v96
    %v334 = vpop.f32.mrf.mxu0
    %v335 = vadd.f32 %v133, %v334
    %v336 = vpop.f32.mrf.mxu0
    %337 = vdwg.mxu0
    %338 = vmatpush.bf16.msra.mxu0 %v266
    %339 = vmatpush.bf16.msra.mxu0 %v262
    %340 = vmatpush.bf16.msra.mxu0 %v258
    %341 = vmatpush.bf16.msra.mxu0 %v254
    %342 = vmatpush.bf16.msra.mxu0 %v250
    %343 = vmatpush.bf16.msra.mxu0 %v246
    %344 = vmatpush.bf16.msra.mxu0 %v242
    %345 = vmatpush.bf16.msra.mxu0 %v238
    %346 = vmatmul.bf16.gmra.mxu0 %v96
    %v347 = vpop.f32.mrf.mxu0
    %v348 = vadd.f32 %v134, %v347
    %v349 = vpop.f32.mrf.mxu0
    %350 = vdwg.mxu0
    %v351 = vmax.f32 %v309, 0.0
    %v352 = vmax.f32 %v322, 0.0
    %v353 = vmax.f32 %v335, 0.0
    %v354 = vmax.f32 %v348, 0.0
    %v355 = vpack.c.bf16 %v351, %v351
    %v356 = vpack.c.bf16 %v352, %v352
    %v357 = vpack.c.bf16 %v353, %v353
    %v358 = vpack.c.bf16 %v354, %v354
    %v359 = vld [vmem:[#allocation2] sm:$0xff]
    %v360 = vld [vmem:[#allocation2 + $0x8] sm:$0xff]
    %v361 = vld [vmem:[#allocation2 + $0x10] sm:$0xff]
    %v362 = vld [vmem:[#allocation2 + $0x18] sm:$0xff]
    %v363 = vld [vmem:[#allocation2 + $0x20] sm:$0xff]
    %v364 = vld [vmem:[#allocation2 + $0x28] sm:$0xff]
    %v365 = vld [vmem:[#allocation2 + $0x30] sm:$0xff]
    %v366 = vld [vmem:[#allocation2 + $0x38] sm:$0xff]
    %v367 = vld [vmem:[#allocation2 + $0x40] sm:$0xff]
    %v368 = vld [vmem:[#allocation2 + $0x48] sm:$0xff]
    %v369 = vld [vmem:[#allocation2 + $0x50] sm:$0xff]
    %v370 = vld [vmem:[#allocation2 + $0x58] sm:$0xff]
    %v371 = vld [vmem:[#allocation2 + $0x60] sm:$0xff]
    %v372 = vld [vmem:[#allocation2 + $0x68] sm:$0xff]
    %v373 = vld [vmem:[#allocation2 + $0x70] sm:$0xff]
    %v374 = vld [vmem:[#allocation2 + $0x78] sm:$0xff]
    %v375 = vld [vmem:[#allocation2 + $0x80] sm:$0xff]
    %v376 = vld [vmem:[#allocation2 + $0x88] sm:$0xff]
    %v377 = vld [vmem:[#allocation2 + $0x90] sm:$0xff]
    %v378 = vld [vmem:[#allocation2 + $0x98] sm:$0xff]
    %v379 = vld [vmem:[#allocation2 + $0xa0] sm:$0xff]
    %v380 = vld [vmem:[#allocation2 + $0xa8] sm:$0xff]
    %v381 = vld [vmem:[#allocation2 + $0xb0] sm:$0xff]
    %v382 = vld [vmem:[#allocation2 + $0xb8] sm:$0xff]
    %v383 = vld [vmem:[#allocation2 + $0xc0] sm:$0xff]
    %v384 = vld [vmem:[#allocation2 + $0xc8] sm:$0xff]
    %v385 = vld [vmem:[#allocation2 + $0xd0] sm:$0xff]
    %v386 = vld [vmem:[#allocation2 + $0xd8] sm:$0xff]
    %v387 = vld [vmem:[#allocation2 + $0xe0] sm:$0xff]
    %v388 = vld [vmem:[#allocation2 + $0xe8] sm:$0xff]
    %v389 = vld [vmem:[#allocation2 + $0xf0] sm:$0xff]
    %v390 = vld [vmem:[#allocation2 + $0xf8] sm:$0xff]
    %v391 = vld [vmem:[#allocation2 + $0x100] sm:$0xff]
    %v392 = vld [vmem:[#allocation2 + $0x108] sm:$0xff]
    %v393 = vld [vmem:[#allocation2 + $0x110] sm:$0xff]
    %v394 = vld [vmem:[#allocation2 + $0x118] sm:$0xff]
    %v395 = vld [vmem:[#allocation2 + $0x120] sm:$0xff]
    %v396 = vld [vmem:[#allocation2 + $0x128] sm:$0xff]
    %v397 = vld [vmem:[#allocation2 + $0x130] sm:$0xff]
    %v398 = vld [vmem:[#allocation2 + $0x138] sm:$0xff]
    %v399 = vld [vmem:[#allocation2 + $0x140] sm:$0xff]
    %v400 = vld [vmem:[#allocation2 + $0x148] sm:$0xff]
    %v401 = vld [vmem:[#allocation2 + $0x150] sm:$0xff]
    %v402 = vld [vmem:[#allocation2 + $0x158] sm:$0xff]
    %v403 = vld [vmem:[#allocation2 + $0x160] sm:$0xff]
    %v404 = vld [vmem:[#allocation2 + $0x168] sm:$0xff]
    %v405 = vld [vmem:[#allocation2 + $0x170] sm:$0xff]
    %v406 = vld [vmem:[#allocation2 + $0x178] sm:$0xff]
    %v407 = vld [vmem:[#allocation2 + $0x180] sm:$0xff]
    %v408 = vld [vmem:[#allocation2 + $0x188] sm:$0xff]
    %v409 = vld [vmem:[#allocation2 + $0x190] sm:$0xff]
    %v410 = vld [vmem:[#allocation2 + $0x198] sm:$0xff]
    %v411 = vld [vmem:[#allocation2 + $0x1a0] sm:$0xff]
    %v412 = vld [vmem:[#allocation2 + $0x1a8] sm:$0xff]
    %v413 = vld [vmem:[#allocation2 + $0x1b0] sm:$0xff]
    %v414 = vld [vmem:[#allocation2 + $0x1b8] sm:$0xff]
    %v415 = vld [vmem:[#allocation2 + $0x1c0] sm:$0xff]
    %v416 = vld [vmem:[#allocation2 + $0x1c8] sm:$0xff]
    %v417 = vld [vmem:[#allocation2 + $0x1d0] sm:$0xff]
    %v418 = vld [vmem:[#allocation2 + $0x1d8] sm:$0xff]
    %v419 = vld [vmem:[#allocation2 + $0x1e0] sm:$0xff]
    %v420 = vld [vmem:[#allocation2 + $0x1e8] sm:$0xff]
    %v421 = vld [vmem:[#allocation2 + $0x1f0] sm:$0xff]
    %v422 = vld [vmem:[#allocation2 + $0x1f8] sm:$0xff]
    %v423 = vld [vmem:[#allocation2 + $0x200] sm:$0xff]
    %v424 = vld [vmem:[#allocation2 + $0x208] sm:$0xff]
    %v425 = vld [vmem:[#allocation2 + $0x210] sm:$0xff]
    %v426 = vld [vmem:[#allocation2 + $0x218] sm:$0xff]
    %v427 = vld [vmem:[#allocation2 + $0x220] sm:$0xff]
    %v428 = vld [vmem:[#allocation2 + $0x228] sm:$0xff]
    %v429 = vld [vmem:[#allocation2 + $0x230] sm:$0xff]
    %v430 = vld [vmem:[#allocation2 + $0x238] sm:$0xff]
    %v431 = vld [vmem:[#allocation2 + $0x240] sm:$0xff]
    %v432 = vld [vmem:[#allocation2 + $0x248] sm:$0xff]
    %v433 = vld [vmem:[#allocation2 + $0x250] sm:$0xff]
    %v434 = vld [vmem:[#allocation2 + $0x258] sm:$0xff]
    %v435 = vld [vmem:[#allocation2 + $0x260] sm:$0xff]
    %v436 = vld [vmem:[#allocation2 + $0x268] sm:$0xff]
    %v437 = vld [vmem:[#allocation2 + $0x270] sm:$0xff]
    %v438 = vld [vmem:[#allocation2 + $0x278] sm:$0xff]
    %v439 = vld [vmem:[#allocation2 + $0x280] sm:$0xff]
    %v440 = vld [vmem:[#allocation2 + $0x288] sm:$0xff]
    %v441 = vld [vmem:[#allocation2 + $0x290] sm:$0xff]
    %v442 = vld [vmem:[#allocation2 + $0x298] sm:$0xff]
    %v443 = vld [vmem:[#allocation2 + $0x2a0] sm:$0xff]
    %v444 = vld [vmem:[#allocation2 + $0x2a8] sm:$0xff]
    %v445 = vld [vmem:[#allocation2 + $0x2b0] sm:$0xff]
    %v446 = vld [vmem:[#allocation2 + $0x2b8] sm:$0xff]
    %v447 = vld [vmem:[#allocation2 + $0x2c0] sm:$0xff]
    %v448 = vld [vmem:[#allocation2 + $0x2c8] sm:$0xff]
    %v449 = vld [vmem:[#allocation2 + $0x2d0] sm:$0xff]
    %v450 = vld [vmem:[#allocation2 + $0x2d8] sm:$0xff]
    %v451 = vld [vmem:[#allocation2 + $0x2e0] sm:$0xff]
    %v452 = vld [vmem:[#allocation2 + $0x2e8] sm:$0xff]
    %v453 = vld [vmem:[#allocation2 + $0x2f0] sm:$0xff]
    %v454 = vld [vmem:[#allocation2 + $0x2f8] sm:$0xff]
    %v455 = vld [vmem:[#allocation2 + $0x300] sm:$0xff]
    %v456 = vld [vmem:[#allocation2 + $0x308] sm:$0xff]
    %v457 = vld [vmem:[#allocation2 + $0x310] sm:$0xff]
    %v458 = vld [vmem:[#allocation2 + $0x318] sm:$0xff]
    %v459 = vld [vmem:[#allocation2 + $0x320] sm:$0xff]
    %v460 = vld [vmem:[#allocation2 + $0x328] sm:$0xff]
    %v461 = vld [vmem:[#allocation2 + $0x330] sm:$0xff]
    %v462 = vld [vmem:[#allocation2 + $0x338] sm:$0xff]
    %v463 = vld [vmem:[#allocation2 + $0x340] sm:$0xff]
    %v464 = vld [vmem:[#allocation2 + $0x348] sm:$0xff]
    %v465 = vld [vmem:[#allocation2 + $0x350] sm:$0xff]
    %v466 = vld [vmem:[#allocation2 + $0x358] sm:$0xff]
    %v467 = vld [vmem:[#allocation2 + $0x360] sm:$0xff]
    %v468 = vld [vmem:[#allocation2 + $0x368] sm:$0xff]
    %v469 = vld [vmem:[#allocation2 + $0x370] sm:$0xff]
    %v470 = vld [vmem:[#allocation2 + $0x378] sm:$0xff]
    %v471 = vld [vmem:[#allocation2 + $0x380] sm:$0xff]
    %v472 = vld [vmem:[#allocation2 + $0x388] sm:$0xff]
    %v473 = vld [vmem:[#allocation2 + $0x390] sm:$0xff]
    %v474 = vld [vmem:[#allocation2 + $0x398] sm:$0xff]
    %v475 = vld [vmem:[#allocation2 + $0x3a0] sm:$0xff]
    %v476 = vld [vmem:[#allocation2 + $0x3a8] sm:$0xff]
    %v477 = vld [vmem:[#allocation2 + $0x3b0] sm:$0xff]
    %v478 = vld [vmem:[#allocation2 + $0x3b8] sm:$0xff]
    %v479 = vld [vmem:[#allocation2 + $0x3c0] sm:$0xff]
    %v480 = vld [vmem:[#allocation2 + $0x3c8] sm:$0xff]
    %v481 = vld [vmem:[#allocation2 + $0x3d0] sm:$0xff]
    %v482 = vld [vmem:[#allocation2 + $0x3d8] sm:$0xff]
    %v483 = vld [vmem:[#allocation2 + $0x3e0] sm:$0xff]
    %v484 = vld [vmem:[#allocation2 + $0x3e8] sm:$0xff]
    %v485 = vld [vmem:[#allocation2 + $0x3f0] sm:$0xff]
    %v486 = vld [vmem:[#allocation2 + $0x3f8] sm:$0xff]
    %v487 = vld [vmem:[%s7] sm:$0xf]
    %v489 = vperm.slane %v487, 0
    %v490 = vperm.slane %v487, 1
    %v491 = vperm.slane %v487, 2
    %v492 = vperm.slane %v487, 3
    %v625 = vunpack.c.l.b16 %v359
    %v626 = vunpack.c.h.b16 %v359
    %v627 = vunpack.c.l.b16 %v360
    %v628 = vunpack.c.h.b16 %v360
    %v629 = vunpack.c.l.b16 %v361
    %v630 = vunpack.c.h.b16 %v361
    %v631 = vunpack.c.l.b16 %v362
    %v632 = vunpack.c.h.b16 %v362
    %v633 = vunpack.c.l.b16 %v363
    %v634 = vunpack.c.h.b16 %v363
    %v635 = vunpack.c.l.b16 %v364
    %v636 = vunpack.c.h.b16 %v364
    %v637 = vunpack.c.l.b16 %v365
    %v638 = vunpack.c.h.b16 %v365
    %v639 = vunpack.c.l.b16 %v366
    %v640 = vunpack.c.h.b16 %v366
    %v641 = vunpack.c.l.b16 %v367
    %v642 = vunpack.c.h.b16 %v367
    %v643 = vunpack.c.l.b16 %v368
    %v644 = vunpack.c.h.b16 %v368
    %v645 = vunpack.c.l.b16 %v369
    %v646 = vunpack.c.h.b16 %v369
    %v647 = vunpack.c.l.b16 %v370
    %v648 = vunpack.c.h.b16 %v370
    %v649 = vunpack.c.l.b16 %v371
    %v650 = vunpack.c.h.b16 %v371
    %v651 = vunpack.c.l.b16 %v372
    %v652 = vunpack.c.h.b16 %v372
    %v653 = vunpack.c.l.b16 %v373
    %v654 = vunpack.c.h.b16 %v373
    %v655 = vunpack.c.l.b16 %v374
    %v656 = vunpack.c.h.b16 %v374
    %v657 = vunpack.c.l.b16 %v375
    %v658 = vunpack.c.h.b16 %v375
    %v659 = vunpack.c.l.b16 %v376
    %v660 = vunpack.c.h.b16 %v376
    %v661 = vunpack.c.l.b16 %v377
    %v662 = vunpack.c.h.b16 %v377
    %v663 = vunpack.c.l.b16 %v378
    %v664 = vunpack.c.h.b16 %v378
    %v665 = vunpack.c.l.b16 %v379
    %v666 = vunpack.c.h.b16 %v379
    %v667 = vunpack.c.l.b16 %v380
    %v668 = vunpack.c.h.b16 %v380
    %v669 = vunpack.c.l.b16 %v381
    %v670 = vunpack.c.h.b16 %v381
    %v671 = vunpack.c.l.b16 %v382
    %v672 = vunpack.c.h.b16 %v382
    %v673 = vunpack.c.l.b16 %v383
    %v674 = vunpack.c.h.b16 %v383
    %v675 = vunpack.c.l.b16 %v384
    %v676 = vunpack.c.h.b16 %v384
    %v677 = vunpack.c.l.b16 %v385
    %v678 = vunpack.c.h.b16 %v385
    %v679 = vunpack.c.l.b16 %v386
    %v680 = vunpack.c.h.b16 %v386
    %v681 = vunpack.c.l.b16 %v387
    %v682 = vunpack.c.h.b16 %v387
    %v683 = vunpack.c.l.b16 %v388
    %v684 = vunpack.c.h.b16 %v388
    %v685 = vunpack.c.l.b16 %v389
    %v686 = vunpack.c.h.b16 %v389
    %v687 = vunpack.c.l.b16 %v390
    %v688 = vunpack.c.h.b16 %v390
    %v689 = vunpack.c.l.b16 %v391
    %v690 = vunpack.c.h.b16 %v391
    %v691 = vunpack.c.l.b16 %v392
    %v692 = vunpack.c.h.b16 %v392
    %v693 = vunpack.c.l.b16 %v393
    %v694 = vunpack.c.h.b16 %v393
    %v695 = vunpack.c.l.b16 %v394
    %v696 = vunpack.c.h.b16 %v394
    %v697 = vunpack.c.l.b16 %v395
    %v698 = vunpack.c.h.b16 %v395
    %v699 = vunpack.c.l.b16 %v396
    %v700 = vunpack.c.h.b16 %v396
    %v701 = vunpack.c.l.b16 %v397
    %v702 = vunpack.c.h.b16 %v397
    %v703 = vunpack.c.l.b16 %v398
    %v704 = vunpack.c.h.b16 %v398
    %v705 = vunpack.c.l.b16 %v399
    %v706 = vunpack.c.h.b16 %v399
    %v707 = vunpack.c.l.b16 %v400
    %v708 = vunpack.c.h.b16 %v400
    %v709 = vunpack.c.l.b16 %v401
    %v710 = vunpack.c.h.b16 %v401
    %v711 = vunpack.c.l.b16 %v402
    %v712 = vunpack.c.h.b16 %v402
    %v713 = vunpack.c.l.b16 %v403
    %v714 = vunpack.c.h.b16 %v403
    %v715 = vunpack.c.l.b16 %v404
    %v716 = vunpack.c.h.b16 %v404
    %v717 = vunpack.c.l.b16 %v405
    %v718 = vunpack.c.h.b16 %v405
    %v719 = vunpack.c.l.b16 %v406
    %v720 = vunpack.c.h.b16 %v406
    %v721 = vunpack.c.l.b16 %v407
    %v722 = vunpack.c.h.b16 %v407
    %v723 = vunpack.c.l.b16 %v408
    %v724 = vunpack.c.h.b16 %v408
    %v725 = vunpack.c.l.b16 %v409
    %v726 = vunpack.c.h.b16 %v409
    %v727 = vunpack.c.l.b16 %v410
    %v728 = vunpack.c.h.b16 %v410
    %v729 = vunpack.c.l.b16 %v411
    %v730 = vunpack.c.h.b16 %v411
    %v731 = vunpack.c.l.b16 %v412
    %v732 = vunpack.c.h.b16 %v412
    %v733 = vunpack.c.l.b16 %v413
    %v734 = vunpack.c.h.b16 %v413
    %v735 = vunpack.c.l.b16 %v414
    %v736 = vunpack.c.h.b16 %v414
    %v737 = vunpack.c.l.b16 %v415
    %v738 = vunpack.c.h.b16 %v415
    %v739 = vunpack.c.l.b16 %v416
    %v740 = vunpack.c.h.b16 %v416
    %v741 = vunpack.c.l.b16 %v417
    %v742 = vunpack.c.h.b16 %v417
    %v743 = vunpack.c.l.b16 %v418
    %v744 = vunpack.c.h.b16 %v418
    %v745 = vunpack.c.l.b16 %v419
    %v746 = vunpack.c.h.b16 %v419
    %v747 = vunpack.c.l.b16 %v420
    %v748 = vunpack.c.h.b16 %v420
    %v749 = vunpack.c.l.b16 %v421
    %v750 = vunpack.c.h.b16 %v421
    %v751 = vunpack.c.l.b16 %v422
    %v752 = vunpack.c.h.b16 %v422
    %v753 = vunpack.c.l.b16 %v423
    %v754 = vunpack.c.h.b16 %v423
    %v755 = vunpack.c.l.b16 %v424
    %v756 = vunpack.c.h.b16 %v424
    %v757 = vunpack.c.l.b16 %v425
    %v758 = vunpack.c.h.b16 %v425
    %v759 = vunpack.c.l.b16 %v426
    %v760 = vunpack.c.h.b16 %v426
    %v761 = vunpack.c.l.b16 %v427
    %v762 = vunpack.c.h.b16 %v427
    %v763 = vunpack.c.l.b16 %v428
    %v764 = vunpack.c.h.b16 %v428
    %v765 = vunpack.c.l.b16 %v429
    %v766 = vunpack.c.h.b16 %v429
    %v767 = vunpack.c.l.b16 %v430
    %v768 = vunpack.c.h.b16 %v430
    %v769 = vunpack.c.l.b16 %v431
    %v770 = vunpack.c.h.b16 %v431
    %v771 = vunpack.c.l.b16 %v432
    %v772 = vunpack.c.h.b16 %v432
    %v773 = vunpack.c.l.b16 %v433
    %v774 = vunpack.c.h.b16 %v433
    %v775 = vunpack.c.l.b16 %v434
    %v776 = vunpack.c.h.b16 %v434
    %v777 = vunpack.c.l.b16 %v435
    %v778 = vunpack.c.h.b16 %v435
    %v779 = vunpack.c.l.b16 %v436
    %v780 = vunpack.c.h.b16 %v436
    %v781 = vunpack.c.l.b16 %v437
    %v782 = vunpack.c.h.b16 %v437
    %v783 = vunpack.c.l.b16 %v438
    %v784 = vunpack.c.h.b16 %v438
    %v785 = vunpack.c.l.b16 %v439
    %v786 = vunpack.c.h.b16 %v439
    %v787 = vunpack.c.l.b16 %v440
    %v788 = vunpack.c.h.b16 %v440
    %v789 = vunpack.c.l.b16 %v441
    %v790 = vunpack.c.h.b16 %v441
    %v791 = vunpack.c.l.b16 %v442
    %v792 = vunpack.c.h.b16 %v442
    %v793 = vunpack.c.l.b16 %v443
    %v794 = vunpack.c.h.b16 %v443
    %v795 = vunpack.c.l.b16 %v444
    %v796 = vunpack.c.h.b16 %v444
    %v797 = vunpack.c.l.b16 %v445
    %v798 = vunpack.c.h.b16 %v445
    %v799 = vunpack.c.l.b16 %v446
    %v800 = vunpack.c.h.b16 %v446
    %v801 = vunpack.c.l.b16 %v447
    %v802 = vunpack.c.h.b16 %v447
    %v803 = vunpack.c.l.b16 %v448
    %v804 = vunpack.c.h.b16 %v448
    %v805 = vunpack.c.l.b16 %v449
    %v806 = vunpack.c.h.b16 %v449
    %v807 = vunpack.c.l.b16 %v450
    %v808 = vunpack.c.h.b16 %v450
    %v809 = vunpack.c.l.b16 %v451
    %v810 = vunpack.c.h.b16 %v451
    %v811 = vunpack.c.l.b16 %v452
    %v812 = vunpack.c.h.b16 %v452
    %v813 = vunpack.c.l.b16 %v453
    %v814 = vunpack.c.h.b16 %v453
    %v815 = vunpack.c.l.b16 %v454
    %v816 = vunpack.c.h.b16 %v454
    %v817 = vunpack.c.l.b16 %v455
    %v818 = vunpack.c.h.b16 %v455
    %v819 = vunpack.c.l.b16 %v456
    %v820 = vunpack.c.h.b16 %v456
    %v821 = vunpack.c.l.b16 %v457
    %v822 = vunpack.c.h.b16 %v457
    %v823 = vunpack.c.l.b16 %v458
    %v824 = vunpack.c.h.b16 %v458
    %v825 = vunpack.c.l.b16 %v459
    %v826 = vunpack.c.h.b16 %v459
    %v827 = vunpack.c.l.b16 %v460
    %v828 = vunpack.c.h.b16 %v460
    %v829 = vunpack.c.l.b16 %v461
    %v830 = vunpack.c.h.b16 %v461
    %v831 = vunpack.c.l.b16 %v462
    %v832 = vunpack.c.h.b16 %v462
    %v833 = vunpack.c.l.b16 %v463
    %v834 = vunpack.c.h.b16 %v463
    %v835 = vunpack.c.l.b16 %v464
    %v836 = vunpack.c.h.b16 %v464
    %v837 = vunpack.c.l.b16 %v465
    %v838 = vunpack.c.h.b16 %v465
    %v839 = vunpack.c.l.b16 %v466
    %v840 = vunpack.c.h.b16 %v466
    %v841 = vunpack.c.l.b16 %v467
    %v842 = vunpack.c.h.b16 %v467
    %v843 = vunpack.c.l.b16 %v468
    %v844 = vunpack.c.h.b16 %v468
    %v845 = vunpack.c.l.b16 %v469
    %v846 = vunpack.c.h.b16 %v469
    %v847 = vunpack.c.l.b16 %v470
    %v848 = vunpack.c.h.b16 %v470
    %v849 = vunpack.c.l.b16 %v471
    %v850 = vunpack.c.h.b16 %v471
    %v851 = vunpack.c.l.b16 %v472
    %v852 = vunpack.c.h.b16 %v472
    %v853 = vunpack.c.l.b16 %v473
    %v854 = vunpack.c.h.b16 %v473
    %v855 = vunpack.c.l.b16 %v474
    %v856 = vunpack.c.h.b16 %v474
    %v857 = vunpack.c.l.b16 %v475
    %v858 = vunpack.c.h.b16 %v475
    %v859 = vunpack.c.l.b16 %v476
    %v860 = vunpack.c.h.b16 %v476
    %v861 = vunpack.c.l.b16 %v477
    %v862 = vunpack.c.h.b16 %v477
    %v863 = vunpack.c.l.b16 %v478
    %v864 = vunpack.c.h.b16 %v478
    %v865 = vunpack.c.l.b16 %v479
    %v866 = vunpack.c.h.b16 %v479
    %v867 = vunpack.c.l.b16 %v480
    %v868 = vunpack.c.h.b16 %v480
    %v869 = vunpack.c.l.b16 %v481
    %v870 = vunpack.c.h.b16 %v481
    %v871 = vunpack.c.l.b16 %v482
    %v872 = vunpack.c.h.b16 %v482
    %v873 = vunpack.c.l.b16 %v483
    %v874 = vunpack.c.h.b16 %v483
    %v875 = vunpack.c.l.b16 %v484
    %v876 = vunpack.c.h.b16 %v484
    %v877 = vunpack.c.l.b16 %v485
    %v878 = vunpack.c.h.b16 %v485
    %v879 = vunpack.c.l.b16 %v486
    %v880 = vunpack.c.h.b16 %v486
    %v881 = vpack.c.b16 %v629, %v625
    %v882 = vpack.c.b16 %v630, %v626
    %v883 = vpack.c.b16 %v631, %v627
    %v884 = vpack.c.b16 %v632, %v628
    %v885 = vpack.c.b16 %v637, %v633
    %v886 = vpack.c.b16 %v638, %v634
    %v887 = vpack.c.b16 %v639, %v635
    %v888 = vpack.c.b16 %v640, %v636
    %v889 = vpack.c.b16 %v645, %v641
    %v890 = vpack.c.b16 %v646, %v642
    %v891 = vpack.c.b16 %v647, %v643
    %v892 = vpack.c.b16 %v648, %v644
    %v893 = vpack.c.b16 %v653, %v649
    %v894 = vpack.c.b16 %v654, %v650
    %v895 = vpack.c.b16 %v655, %v651
    %v896 = vpack.c.b16 %v656, %v652
    %v897 = vpack.c.b16 %v661, %v657
    %v898 = vpack.c.b16 %v662, %v658
    %v899 = vpack.c.b16 %v663, %v659
    %v900 = vpack.c.b16 %v664, %v660
    %v901 = vpack.c.b16 %v669, %v665
    %v902 = vpack.c.b16 %v670, %v666
    %v903 = vpack.c.b16 %v671, %v667
    %v904 = vpack.c.b16 %v672, %v668
    %v905 = vpack.c.b16 %v677, %v673
    %v906 = vpack.c.b16 %v678, %v674
    %v907 = vpack.c.b16 %v679, %v675
    %v908 = vpack.c.b16 %v680, %v676
    %v909 = vpack.c.b16 %v685, %v681
    %v910 = vpack.c.b16 %v686, %v682
    %v911 = vpack.c.b16 %v687, %v683
    %v912 = vpack.c.b16 %v688, %v684
    %v913 = vpack.c.b16 %v693, %v689
    %v914 = vpack.c.b16 %v694, %v690
    %v915 = vpack.c.b16 %v695, %v691
    %v916 = vpack.c.b16 %v696, %v692
    %v917 = vpack.c.b16 %v701, %v697
    %v918 = vpack.c.b16 %v702, %v698
    %v919 = vpack.c.b16 %v703, %v699
    %v920 = vpack.c.b16 %v704, %v700
    %v921 = vpack.c.b16 %v709, %v705
    %v922 = vpack.c.b16 %v710, %v706
    %v923 = vpack.c.b16 %v711, %v707
    %v924 = vpack.c.b16 %v712, %v708
    %v925 = vpack.c.b16 %v717, %v713
    %v926 = vpack.c.b16 %v718, %v714
    %v927 = vpack.c.b16 %v719, %v715
    %v928 = vpack.c.b16 %v720, %v716
    %v929 = vpack.c.b16 %v725, %v721
    %v930 = vpack.c.b16 %v726, %v722
    %v931 = vpack.c.b16 %v727, %v723
    %v932 = vpack.c.b16 %v728, %v724
    %v933 = vpack.c.b16 %v733, %v729
    %v934 = vpack.c.b16 %v734, %v730
    %v935 = vpack.c.b16 %v735, %v731
    %v936 = vpack.c.b16 %v736, %v732
    %v937 = vpack.c.b16 %v741, %v737
    %v938 = vpack.c.b16 %v742, %v738
    %v939 = vpack.c.b16 %v743, %v739
    %v940 = vpack.c.b16 %v744, %v740
    %v941 = vpack.c.b16 %v749, %v745
    %v942 = vpack.c.b16 %v750, %v746
    %v943 = vpack.c.b16 %v751, %v747
    %v944 = vpack.c.b16 %v752, %v748
    %v945 = vpack.c.b16 %v757, %v753
    %v946 = vpack.c.b16 %v758, %v754
    %v947 = vpack.c.b16 %v759, %v755
    %v948 = vpack.c.b16 %v760, %v756
    %v949 = vpack.c.b16 %v765, %v761
    %v950 = vpack.c.b16 %v766, %v762
    %v951 = vpack.c.b16 %v767, %v763
    %v952 = vpack.c.b16 %v768, %v764
    %v953 = vpack.c.b16 %v773, %v769
    %v954 = vpack.c.b16 %v774, %v770
    %v955 = vpack.c.b16 %v775, %v771
    %v956 = vpack.c.b16 %v776, %v772
    %v957 = vpack.c.b16 %v781, %v777
    %v958 = vpack.c.b16 %v782, %v778
    %v959 = vpack.c.b16 %v783, %v779
    %v960 = vpack.c.b16 %v784, %v780
    %v961 = vpack.c.b16 %v789, %v785
    %v962 = vpack.c.b16 %v790, %v786
    %v963 = vpack.c.b16 %v791, %v787
    %v964 = vpack.c.b16 %v792, %v788
    %v965 = vpack.c.b16 %v797, %v793
    %v966 = vpack.c.b16 %v798, %v794
    %v967 = vpack.c.b16 %v799, %v795
    %v968 = vpack.c.b16 %v800, %v796
    %v969 = vpack.c.b16 %v805, %v801
    %v970 = vpack.c.b16 %v806, %v802
    %v971 = vpack.c.b16 %v807, %v803
    %v972 = vpack.c.b16 %v808, %v804
    %v973 = vpack.c.b16 %v813, %v809
    %v974 = vpack.c.b16 %v814, %v810
    %v975 = vpack.c.b16 %v815, %v811
    %v976 = vpack.c.b16 %v816, %v812
    %v977 = vpack.c.b16 %v821, %v817
    %v978 = vpack.c.b16 %v822, %v818
    %v979 = vpack.c.b16 %v823, %v819
    %v980 = vpack.c.b16 %v824, %v820
    %v981 = vpack.c.b16 %v829, %v825
    %v982 = vpack.c.b16 %v830, %v826
    %v983 = vpack.c.b16 %v831, %v827
    %v984 = vpack.c.b16 %v832, %v828
    %v985 = vpack.c.b16 %v837, %v833
    %v986 = vpack.c.b16 %v838, %v834
    %v987 = vpack.c.b16 %v839, %v835
    %v988 = vpack.c.b16 %v840, %v836
    %v989 = vpack.c.b16 %v845, %v841
    %v990 = vpack.c.b16 %v846, %v842
    %v991 = vpack.c.b16 %v847, %v843
    %v992 = vpack.c.b16 %v848, %v844
    %v993 = vpack.c.b16 %v853, %v849
    %v994 = vpack.c.b16 %v854, %v850
    %v995 = vpack.c.b16 %v855, %v851
    %v996 = vpack.c.b16 %v856, %v852
    %v997 = vpack.c.b16 %v861, %v857
    %v998 = vpack.c.b16 %v862, %v858
    %v999 = vpack.c.b16 %v863, %v859
    %v1000 = vpack.c.b16 %v864, %v860
    %v1001 = vpack.c.b16 %v869, %v865
    %v1002 = vpack.c.b16 %v870, %v866
    %v1003 = vpack.c.b16 %v871, %v867
    %v1004 = vpack.c.b16 %v872, %v868
    %v1005 = vpack.c.b16 %v877, %v873
    %v1006 = vpack.c.b16 %v878, %v874
    %v1007 = vpack.c.b16 %v879, %v875
    %v1008 = vpack.c.b16 %v880, %v876
    %1137 = vmatpush.bf16.msra.mxu0 %v909
    %1138 = vmatpush.bf16.msra.mxu0 %v905
    %1139 = vmatpush.bf16.msra.mxu0 %v901
    %1140 = vmatpush.bf16.msra.mxu0 %v897
    %1141 = vmatpush.bf16.msra.mxu0 %v893
    %1142 = vmatpush.bf16.msra.mxu0 %v889
    %1143 = vmatpush.bf16.msra.mxu0 %v885
    %1144 = vmatpush.bf16.msra.mxu0 %v881
    %1145 = vmatmul.bf16.gmra.mxu0 %v355
    %v1146 = vpop.f32.mrf.mxu0
    %v1147 = vadd.f32 %v489, %v1146
    %v1148 = vpop.f32.mrf.mxu0
    %1149 = vdwg.mxu0
    %1150 = vmatpush.bf16.msra.mxu0 %v941
    %1151 = vmatpush.bf16.msra.mxu0 %v937
    %1152 = vmatpush.bf16.msra.mxu0 %v933
    %1153 = vmatpush.bf16.msra.mxu0 %v929
    %1154 = vmatpush.bf16.msra.mxu0 %v925
    %1155 = vmatpush.bf16.msra.mxu0 %v921
    %1156 = vmatpush.bf16.msra.mxu0 %v917
    %1157 = vmatpush.bf16.msra.mxu0 %v913
    %1158 = vmatmul.bf16.gmra.mxu0 %v356
    %v1159 = vpop.f32.mrf.mxu0
    %v1160 = vadd.f32 %v1147, %v1159
    %v1161 = vpop.f32.mrf.mxu0
    %1162 = vdwg.mxu0
    %1163 = vmatpush.bf16.msra.mxu0 %v973
    %1164 = vmatpush.bf16.msra.mxu0 %v969
    %1165 = vmatpush.bf16.msra.mxu0 %v965
    %1166 = vmatpush.bf16.msra.mxu0 %v961
    %1167 = vmatpush.bf16.msra.mxu0 %v957
    %1168 = vmatpush.bf16.msra.mxu0 %v953
    %1169 = vmatpush.bf16.msra.mxu0 %v949
    %1170 = vmatpush.bf16.msra.mxu0 %v945
    %1171 = vmatmul.bf16.gmra.mxu0 %v357
    %v1172 = vpop.f32.mrf.mxu0
    %v1173 = vadd.f32 %v1160, %v1172
    %v1174 = vpop.f32.mrf.mxu0
    %1175 = vdwg.mxu0
    %1176 = vmatpush.bf16.msra.mxu0 %v1005
    %1177 = vmatpush.bf16.msra.mxu0 %v1001
    %1178 = vmatpush.bf16.msra.mxu0 %v997
    %1179 = vmatpush.bf16.msra.mxu0 %v993
    %1180 = vmatpush.bf16.msra.mxu0 %v989
    %1181 = vmatpush.bf16.msra.mxu0 %v985
    %1182 = vmatpush.bf16.msra.mxu0 %v981
    %1183 = vmatpush.bf16.msra.mxu0 %v977
    %1184 = vmatmul.bf16.gmra.mxu0 %v358
    %v1185 = vpop.f32.mrf.mxu0
    %v1186 = vadd.f32 %v1173, %v1185
    %v1187 = vpop.f32.mrf.mxu0
    %1188 = vdwg.mxu0
    %1189 = vmatpush.bf16.msra.mxu0 %v910
    %1190 = vmatpush.bf16.msra.mxu0 %v906
    %1191 = vmatpush.bf16.msra.mxu0 %v902
    %1192 = vmatpush.bf16.msra.mxu0 %v898
    %1193 = vmatpush.bf16.msra.mxu0 %v894
    %1194 = vmatpush.bf16.msra.mxu0 %v890
    %1195 = vmatpush.bf16.msra.mxu0 %v886
    %1196 = vmatpush.bf16.msra.mxu0 %v882
    %1197 = vmatmul.bf16.gmra.mxu0 %v355
    %v1198 = vpop.f32.mrf.mxu0
    %v1199 = vadd.f32 %v490, %v1198
    %v1200 = vpop.f32.mrf.mxu0
    %1201 = vdwg.mxu0
    %1202 = vmatpush.bf16.msra.mxu0 %v942
    %1203 = vmatpush.bf16.msra.mxu0 %v938
    %1204 = vmatpush.bf16.msra.mxu0 %v934
    %1205 = vmatpush.bf16.msra.mxu0 %v930
    %1206 = vmatpush.bf16.msra.mxu0 %v926
    %1207 = vmatpush.bf16.msra.mxu0 %v922
    %1208 = vmatpush.bf16.msra.mxu0 %v918
    %1209 = vmatpush.bf16.msra.mxu0 %v914
    %1210 = vmatmul.bf16.gmra.mxu0 %v356
    %v1211 = vpop.f32.mrf.mxu0
    %v1212 = vadd.f32 %v1199, %v1211
    %v1213 = vpop.f32.mrf.mxu0
    %1214 = vdwg.mxu0
    %1215 = vmatpush.bf16.msra.mxu0 %v974
    %1216 = vmatpush.bf16.msra.mxu0 %v970
    %1217 = vmatpush.bf16.msra.mxu0 %v966
    %1218 = vmatpush.bf16.msra.mxu0 %v962
    %1219 = vmatpush.bf16.msra.mxu0 %v958
    %1220 = vmatpush.bf16.msra.mxu0 %v954
    %1221 = vmatpush.bf16.msra.mxu0 %v950
    %1222 = vmatpush.bf16.msra.mxu0 %v946
    %1223 = vmatmul.bf16.gmra.mxu0 %v357
    %v1224 = vpop.f32.mrf.mxu0
    %v1225 = vadd.f32 %v1212, %v1224
    %v1226 = vpop.f32.mrf.mxu0
    %1227 = vdwg.mxu0
    %1228 = vmatpush.bf16.msra.mxu0 %v1006
    %1229 = vmatpush.bf16.msra.mxu0 %v1002
    %1230 = vmatpush.bf16.msra.mxu0 %v998
    %1231 = vmatpush.bf16.msra.mxu0 %v994
    %1232 = vmatpush.bf16.msra.mxu0 %v990
    %1233 = vmatpush.bf16.msra.mxu0 %v986
    %1234 = vmatpush.bf16.msra.mxu0 %v982
    %1235 = vmatpush.bf16.msra.mxu0 %v978
    %1236 = vmatmul.bf16.gmra.mxu0 %v358
    %v1237 = vpop.f32.mrf.mxu0
    %v1238 = vadd.f32 %v1225, %v1237
    %v1239 = vpop.f32.mrf.mxu0
    %1240 = vdwg.mxu0
    %1241 = vmatpush.bf16.msra.mxu0 %v911
    %1242 = vmatpush.bf16.msra.mxu0 %v907
    %1243 = vmatpush.bf16.msra.mxu0 %v903
    %1244 = vmatpush.bf16.msra.mxu0 %v899
    %1245 = vmatpush.bf16.msra.mxu0 %v895
    %1246 = vmatpush.bf16.msra.mxu0 %v891
    %1247 = vmatpush.bf16.msra.mxu0 %v887
    %1248 = vmatpush.bf16.msra.mxu0 %v883
    %1249 = vmatmul.bf16.gmra.mxu0 %v355
    %v1250 = vpop.f32.mrf.mxu0
    %v1251 = vadd.f32 %v491, %v1250
    %v1252 = vpop.f32.mrf.mxu0
    %1253 = vdwg.mxu0
    %1254 = vmatpush.bf16.msra.mxu0 %v943
    %1255 = vmatpush.bf16.msra.mxu0 %v939
    %1256 = vmatpush.bf16.msra.mxu0 %v935
    %1257 = vmatpush.bf16.msra.mxu0 %v931
    %1258 = vmatpush.bf16.msra.mxu0 %v927
    %1259 = vmatpush.bf16.msra.mxu0 %v923
    %1260 = vmatpush.bf16.msra.mxu0 %v919
    %1261 = vmatpush.bf16.msra.mxu0 %v915
    %1262 = vmatmul.bf16.gmra.mxu0 %v356
    %v1263 = vpop.f32.mrf.mxu0
    %v1264 = vadd.f32 %v1251, %v1263
    %v1265 = vpop.f32.mrf.mxu0
    %1266 = vdwg.mxu0
    %1267 = vmatpush.bf16.msra.mxu0 %v975
    %1268 = vmatpush.bf16.msra.mxu0 %v971
    %1269 = vmatpush.bf16.msra.mxu0 %v967
    %1270 = vmatpush.bf16.msra.mxu0 %v963
    %1271 = vmatpush.bf16.msra.mxu0 %v959
    %1272 = vmatpush.bf16.msra.mxu0 %v955
    %1273 = vmatpush.bf16.msra.mxu0 %v951
    %1274 = vmatpush.bf16.msra.mxu0 %v947
    %1275 = vmatmul.bf16.gmra.mxu0 %v357
    %v1276 = vpop.f32.mrf.mxu0
    %v1277 = vadd.f32 %v1264, %v1276
    %v1278 = vpop.f32.mrf.mxu0
    %1279 = vdwg.mxu0
    %1280 = vmatpush.bf16.msra.mxu0 %v1007
    %1281 = vmatpush.bf16.msra.mxu0 %v1003
    %1282 = vmatpush.bf16.msra.mxu0 %v999
    %1283 = vmatpush.bf16.msra.mxu0 %v995
    %1284 = vmatpush.bf16.msra.mxu0 %v991
    %1285 = vmatpush.bf16.msra.mxu0 %v987
    %1286 = vmatpush.bf16.msra.mxu0 %v983
    %1287 = vmatpush.bf16.msra.mxu0 %v979
    %1288 = vmatmul.bf16.gmra.mxu0 %v358
    %v1289 = vpop.f32.mrf.mxu0
    %v1290 = vadd.f32 %v1277, %v1289
    %v1291 = vpop.f32.mrf.mxu0
    %1292 = vdwg.mxu0
    %1293 = vmatpush.bf16.msra.mxu0 %v912
    %1294 = vmatpush.bf16.msra.mxu0 %v908
    %1295 = vmatpush.bf16.msra.mxu0 %v904
    %1296 = vmatpush.bf16.msra.mxu0 %v900
    %1297 = vmatpush.bf16.msra.mxu0 %v896
    %1298 = vmatpush.bf16.msra.mxu0 %v892
    %1299 = vmatpush.bf16.msra.mxu0 %v888
    %1300 = vmatpush.bf16.msra.mxu0 %v884
    %1301 = vmatmul.bf16.gmra.mxu0 %v355
    %v1302 = vpop.f32.mrf.mxu0
    %v1303 = vadd.f32 %v492, %v1302
    %v1304 = vpop.f32.mrf.mxu0
    %1305 = vdwg.mxu0
    %1306 = vmatpush.bf16.msra.mxu0 %v944
    %1307 = vmatpush.bf16.msra.mxu0 %v940
    %1308 = vmatpush.bf16.msra.mxu0 %v936
    %1309 = vmatpush.bf16.msra.mxu0 %v932
    %1310 = vmatpush.bf16.msra.mxu0 %v928
    %1311 = vmatpush.bf16.msra.mxu0 %v924
    %1312 = vmatpush.bf16.msra.mxu0 %v920
    %1313 = vmatpush.bf16.msra.mxu0 %v916
    %1314 = vmatmul.bf16.gmra.mxu0 %v356
    %v1315 = vpop.f32.mrf.mxu0
    %v1316 = vadd.f32 %v1303, %v1315
    %v1317 = vpop.f32.mrf.mxu0
    %1318 = vdwg.mxu0
    %1319 = vmatpush.bf16.msra.mxu0 %v976
    %1320 = vmatpush.bf16.msra.mxu0 %v972
    %1321 = vmatpush.bf16.msra.mxu0 %v968
    %1322 = vmatpush.bf16.msra.mxu0 %v964
    %1323 = vmatpush.bf16.msra.mxu0 %v960
    %1324 = vmatpush.bf16.msra.mxu0 %v956
    %1325 = vmatpush.bf16.msra.mxu0 %v952
    %1326 = vmatpush.bf16.msra.mxu0 %v948
    %1327 = vmatmul.bf16.gmra.mxu0 %v357
    %v1328 = vpop.f32.mrf.mxu0
    %v1329 = vadd.f32 %v1316, %v1328
    %v1330 = vpop.f32.mrf.mxu0
    %1331 = vdwg.mxu0
    %1332 = vmatpush.bf16.msra.mxu0 %v1008
    %1333 = vmatpush.bf16.msra.mxu0 %v1004
    %1334 = vmatpush.bf16.msra.mxu0 %v1000
    %1335 = vmatpush.bf16.msra.mxu0 %v996
    %1336 = vmatpush.bf16.msra.mxu0 %v992
    %1337 = vmatpush.bf16.msra.mxu0 %v988
    %1338 = vmatpush.bf16.msra.mxu0 %v984
    %1339 = vmatpush.bf16.msra.mxu0 %v980
    %1340 = vmatmul.bf16.gmra.mxu0 %v358
    %v1341 = vpop.f32.mrf.mxu0
    %v1342 = vadd.f32 %v1329, %v1341
    %v1343 = vpop.f32.mrf.mxu0
    %1344 = vdwg.mxu0
    %v1345 = vmax.f32 %v1186, 0.0
    %v1346 = vmax.f32 %v1238, 0.0
    %v1347 = vmax.f32 %v1290, 0.0
    %v1348 = vmax.f32 %v1342, 0.0
    %v1349 = vpack.c.bf16 %v1345, %v1345
    %v1350 = vpack.c.bf16 %v1346, %v1346
    %v1351 = vpack.c.bf16 %v1347, %v1347
    %v1352 = vpack.c.bf16 %v1348, %v1348
    %v1353 = vld [vmem:[%s8] sm:$0xf]
    %v1354 = vld [vmem:[%s8 + $0x4] sm:$0xf]
    %v1355 = vld [vmem:[%s8 + $0x8] sm:$0xf]
    %v1356 = vld [vmem:[%s8 + $0xc] sm:$0xf]
    %v1357 = vld [vmem:[%s8 + $0x10] sm:$0xf]
    %v1358 = vld [vmem:[%s8 + $0x14] sm:$0xf]
    %v1359 = vld [vmem:[%s8 + $0x18] sm:$0xf]
    %v1360 = vld [vmem:[%s8 + $0x1c] sm:$0xf]
    %v1361 = vld [vmem:[%s8 + $0x20] sm:$0xf]
    %v1362 = vld [vmem:[%s8 + $0x24] sm:$0xf]
    %v1363 = vld [vmem:[%s8 + $0x28] sm:$0xf]
    %v1364 = vld [vmem:[%s8 + $0x2c] sm:$0xf]
    %v1365 = vld [vmem:[%s8 + $0x30] sm:$0xf]
    %v1366 = vld [vmem:[%s8 + $0x34] sm:$0xf]
    %v1367 = vld [vmem:[%s8 + $0x38] sm:$0xf]
    %v1368 = vld [vmem:[%s8 + $0x3c] sm:$0xf]
    %v1369 = vld [vmem:[%s8 + $0x40] sm:$0xf]
    %v1370 = vld [vmem:[%s8 + $0x44] sm:$0xf]
    %v1371 = vld [vmem:[%s8 + $0x48] sm:$0xf]
    %v1372 = vld [vmem:[%s8 + $0x4c] sm:$0xf]
    %v1373 = vld [vmem:[%s8 + $0x50] sm:$0xf]
    %v1374 = vld [vmem:[%s8 + $0x54] sm:$0xf]
    %v1375 = vld [vmem:[%s8 + $0x58] sm:$0xf]
    %v1376 = vld [vmem:[%s8 + $0x5c] sm:$0xf]
    %v1377 = vld [vmem:[%s8 + $0x60] sm:$0xf]
    %v1378 = vld [vmem:[%s8 + $0x64] sm:$0xf]
    %v1379 = vld [vmem:[%s8 + $0x68] sm:$0xf]
    %v1380 = vld [vmem:[%s8 + $0x6c] sm:$0xf]
    %v1381 = vld [vmem:[%s8 + $0x70] sm:$0xf]
    %v1382 = vld [vmem:[%s8 + $0x74] sm:$0xf]
    %v1383 = vld [vmem:[%s8 + $0x78] sm:$0xf]
    %v1384 = vld [vmem:[%s8 + $0x7c] sm:$0xf]
    %v1385 = vld [vmem:[%s8 + $0x80] sm:$0xf]
    %v1386 = vld [vmem:[%s8 + $0x84] sm:$0xf]
    %v1387 = vld [vmem:[%s8 + $0x88] sm:$0xf]
    %v1388 = vld [vmem:[%s8 + $0x8c] sm:$0xf]
    %v1389 = vld [vmem:[%s8 + $0x90] sm:$0xf]
    %v1390 = vld [vmem:[%s8 + $0x94] sm:$0xf]
    %v1391 = vld [vmem:[%s8 + $0x98] sm:$0xf]
    %v1392 = vld [vmem:[%s8 + $0x9c] sm:$0xf]
    %v1393 = vld [vmem:[%s8 + $0xa0] sm:$0xf]
    %v1394 = vld [vmem:[%s8 + $0xa4] sm:$0xf]
    %v1395 = vld [vmem:[%s8 + $0xa8] sm:$0xf]
    %v1396 = vld [vmem:[%s8 + $0xac] sm:$0xf]
    %v1397 = vld [vmem:[%s8 + $0xb0] sm:$0xf]
    %v1398 = vld [vmem:[%s8 + $0xb4] sm:$0xf]
    %v1399 = vld [vmem:[%s8 + $0xb8] sm:$0xf]
    %v1400 = vld [vmem:[%s8 + $0xbc] sm:$0xf]
    %v1401 = vld [vmem:[%s8 + $0xc0] sm:$0xf]
    %v1402 = vld [vmem:[%s8 + $0xc4] sm:$0xf]
    %v1403 = vld [vmem:[%s8 + $0xc8] sm:$0xf]
    %v1404 = vld [vmem:[%s8 + $0xcc] sm:$0xf]
    %v1405 = vld [vmem:[%s8 + $0xd0] sm:$0xf]
    %v1406 = vld [vmem:[%s8 + $0xd4] sm:$0xf]
    %v1407 = vld [vmem:[%s8 + $0xd8] sm:$0xf]
    %v1408 = vld [vmem:[%s8 + $0xdc] sm:$0xf]
    %v1409 = vld [vmem:[%s8 + $0xe0] sm:$0xf]
    %v1410 = vld [vmem:[%s8 + $0xe4] sm:$0xf]
    %v1411 = vld [vmem:[%s8 + $0xe8] sm:$0xf]
    %v1412 = vld [vmem:[%s8 + $0xec] sm:$0xf]
    %v1413 = vld [vmem:[%s8 + $0xf0] sm:$0xf]
    %v1414 = vld [vmem:[%s8 + $0xf4] sm:$0xf]
    %v1415 = vld [vmem:[%s8 + $0xf8] sm:$0xf]
    %v1416 = vld [vmem:[%s8 + $0xfc] sm:$0xf]
    %v1417 = vld [vmem:[%s9] sm:$0x1]
    %v1419 = vperm.slane %v1417, 0
    %v1485 = vunpack.c.l.b16 %v1353
    %v1486 = vunpack.c.l.b16 %v1354
    %v1487 = vunpack.c.l.b16 %v1355
    %v1488 = vunpack.c.l.b16 %v1356
    %v1489 = vunpack.c.l.b16 %v1357
    %v1490 = vunpack.c.l.b16 %v1358
    %v1491 = vunpack.c.l.b16 %v1359
    %v1492 = vunpack.c.l.b16 %v1360
    %v1493 = vunpack.c.l.b16 %v1361
    %v1494 = vunpack.c.l.b16 %v1362
    %v1495 = vunpack.c.l.b16 %v1363
    %v1496 = vunpack.c.l.b16 %v1364
    %v1497 = vunpack.c.l.b16 %v1365
    %v1498 = vunpack.c.l.b16 %v1366
    %v1499 = vunpack.c.l.b16 %v1367
    %v1500 = vunpack.c.l.b16 %v1368
    %v1501 = vunpack.c.l.b16 %v1369
    %v1502 = vunpack.c.l.b16 %v1370
    %v1503 = vunpack.c.l.b16 %v1371
    %v1504 = vunpack.c.l.b16 %v1372
    %v1505 = vunpack.c.l.b16 %v1373
    %v1506 = vunpack.c.l.b16 %v1374
    %v1507 = vunpack.c.l.b16 %v1375
    %v1508 = vunpack.c.l.b16 %v1376
    %v1509 = vunpack.c.l.b16 %v1377
    %v1510 = vunpack.c.l.b16 %v1378
    %v1511 = vunpack.c.l.b16 %v1379
    %v1512 = vunpack.c.l.b16 %v1380
    %v1513 = vunpack.c.l.b16 %v1381
    %v1514 = vunpack.c.l.b16 %v1382
    %v1515 = vunpack.c.l.b16 %v1383
    %v1516 = vunpack.c.l.b16 %v1384
    %v1517 = vunpack.c.l.b16 %v1385
    %v1518 = vunpack.c.l.b16 %v1386
    %v1519 = vunpack.c.l.b16 %v1387
    %v1520 = vunpack.c.l.b16 %v1388
    %v1521 = vunpack.c.l.b16 %v1389
    %v1522 = vunpack.c.l.b16 %v1390
    %v1523 = vunpack.c.l.b16 %v1391
    %v1524 = vunpack.c.l.b16 %v1392
    %v1525 = vunpack.c.l.b16 %v1393
    %v1526 = vunpack.c.l.b16 %v1394
    %v1527 = vunpack.c.l.b16 %v1395
    %v1528 = vunpack.c.l.b16 %v1396
    %v1529 = vunpack.c.l.b16 %v1397
    %v1530 = vunpack.c.l.b16 %v1398
    %v1531 = vunpack.c.l.b16 %v1399
    %v1532 = vunpack.c.l.b16 %v1400
    %v1533 = vunpack.c.l.b16 %v1401
    %v1534 = vunpack.c.l.b16 %v1402
    %v1535 = vunpack.c.l.b16 %v1403
    %v1536 = vunpack.c.l.b16 %v1404
    %v1537 = vunpack.c.l.b16 %v1405
    %v1538 = vunpack.c.l.b16 %v1406
    %v1539 = vunpack.c.l.b16 %v1407
    %v1540 = vunpack.c.l.b16 %v1408
    %v1541 = vunpack.c.l.b16 %v1409
    %v1542 = vunpack.c.l.b16 %v1410
    %v1543 = vunpack.c.l.b16 %v1411
    %v1544 = vunpack.c.l.b16 %v1412
    %v1545 = vunpack.c.l.b16 %v1413
    %v1546 = vunpack.c.l.b16 %v1414
    %v1547 = vunpack.c.l.b16 %v1415
    %v1548 = vunpack.c.l.b16 %v1416
    %v1549 = vpack.c.b16 %v1486, %v1485
    %v1550 = vpack.c.b16 %v1488, %v1487
    %v1551 = vpack.c.b16 %v1490, %v1489
    %v1552 = vpack.c.b16 %v1492, %v1491
    %v1553 = vpack.c.b16 %v1494, %v1493
    %v1554 = vpack.c.b16 %v1496, %v1495
    %v1555 = vpack.c.b16 %v1498, %v1497
    %v1556 = vpack.c.b16 %v1500, %v1499
    %v1557 = vpack.c.b16 %v1502, %v1501
    %v1558 = vpack.c.b16 %v1504, %v1503
    %v1559 = vpack.c.b16 %v1506, %v1505
    %v1560 = vpack.c.b16 %v1508, %v1507
    %v1561 = vpack.c.b16 %v1510, %v1509
    %v1562 = vpack.c.b16 %v1512, %v1511
    %v1563 = vpack.c.b16 %v1514, %v1513
    %v1564 = vpack.c.b16 %v1516, %v1515
    %v1565 = vpack.c.b16 %v1518, %v1517
    %v1566 = vpack.c.b16 %v1520, %v1519
    %v1567 = vpack.c.b16 %v1522, %v1521
    %v1568 = vpack.c.b16 %v1524, %v1523
    %v1569 = vpack.c.b16 %v1526, %v1525
    %v1570 = vpack.c.b16 %v1528, %v1527
    %v1571 = vpack.c.b16 %v1530, %v1529
    %v1572 = vpack.c.b16 %v1532, %v1531
    %v1573 = vpack.c.b16 %v1534, %v1533
    %v1574 = vpack.c.b16 %v1536, %v1535
    %v1575 = vpack.c.b16 %v1538, %v1537
    %v1576 = vpack.c.b16 %v1540, %v1539
    %v1577 = vpack.c.b16 %v1542, %v1541
    %v1578 = vpack.c.b16 %v1544, %v1543
    %v1579 = vpack.c.b16 %v1546, %v1545
    %v1580 = vpack.c.b16 %v1548, %v1547
    %1613 = vmatpush.bf16.msra.mxu0 %v1556
    %1614 = vmatpush.bf16.msra.mxu0 %v1555
    %1615 = vmatpush.bf16.msra.mxu0 %v1554
    %1616 = vmatpush.bf16.msra.mxu0 %v1553
    %1617 = vmatpush.bf16.msra.mxu0 %v1552
    %1618 = vmatpush.bf16.msra.mxu0 %v1551
    %1619 = vmatpush.bf16.msra.mxu0 %v1550
    %1620 = vmatpush.bf16.msra.mxu0 %v1549
    %1621 = vmatmul.bf16.gmra.mxu0 %v1349
    %v1622 = vpop.f32.mrf.mxu0
    %v1623 = vadd.f32 %v1419, %v1622
    %v1624 = vpop.f32.mrf.mxu0
    %1625 = vdwg.mxu0
    %1626 = vmatpush.bf16.msra.mxu0 %v1564
    %1627 = vmatpush.bf16.msra.mxu0 %v1563
    %1628 = vmatpush.bf16.msra.mxu0 %v1562
    %1629 = vmatpush.bf16.msra.mxu0 %v1561
    %1630 = vmatpush.bf16.msra.mxu0 %v1560
    %1631 = vmatpush.bf16.msra.mxu0 %v1559
    %1632 = vmatpush.bf16.msra.mxu0 %v1558
    %1633 = vmatpush.bf16.msra.mxu0 %v1557
    %1634 = vmatmul.bf16.gmra.mxu0 %v1350
    %v1635 = vpop.f32.mrf.mxu0
    %v1636 = vadd.f32 %v1623, %v1635
    %v1637 = vpop.f32.mrf.mxu0
    %1638 = vdwg.mxu0
    %1639 = vmatpush.bf16.msra.mxu0 %v1572
    %1640 = vmatpush.bf16.msra.mxu0 %v1571
    %1641 = vmatpush.bf16.msra.mxu0 %v1570
    %1642 = vmatpush.bf16.msra.mxu0 %v1569
    %1643 = vmatpush.bf16.msra.mxu0 %v1568
    %1644 = vmatpush.bf16.msra.mxu0 %v1567
    %1645 = vmatpush.bf16.msra.mxu0 %v1566
    %1646 = vmatpush.bf16.msra.mxu0 %v1565
    %1647 = vmatmul.bf16.gmra.mxu0 %v1351
    %v1648 = vpop.f32.mrf.mxu0
    %v1649 = vadd.f32 %v1636, %v1648
    %v1650 = vpop.f32.mrf.mxu0
    %1651 = vdwg.mxu0
    %1652 = vmatpush.bf16.msra.mxu0 %v1580
    %1653 = vmatpush.bf16.msra.mxu0 %v1579
    %1654 = vmatpush.bf16.msra.mxu0 %v1578
    %1655 = vmatpush.bf16.msra.mxu0 %v1577
    %1656 = vmatpush.bf16.msra.mxu0 %v1576
    %1657 = vmatpush.bf16.msra.mxu0 %v1575
    %1658 = vmatpush.bf16.msra.mxu0 %v1574
    %1659 = vmatpush.bf16.msra.mxu0 %v1573
    %1660 = vmatmul.bf16.gmra.mxu0 %v1352
    %v1661 = vpop.f32.mrf.mxu0
    %v1662 = vadd.f32 %v1649, %v1661
    %v1663 = vpop.f32.mrf.mxu0
    %1664 = vdwg.mxu0
    %v1665 = vld [vmem:[%s1] sm:$0xff]
    %vm1666 = vcmp.ne.s32.totalorder %v1665, 0
    %v1667 = vsel %vm1666, %v1662, -inf
    %1668 = vst [vmem:[#allocation5] sm:$0xff] %v1667
    %1669 = vmax.xlane.f32.xlu0 %v1667
    %v1670 = vpop.xlane.xlu0 %1669
    %v1671 = vsub.f32 %v1667, %v1670
    %v1672 = vmul.f32 %v1671, 1.442695
    %v1673 = vpow.pop %v1672
    %1674 = vadd.xlane.f32.xlu0 %v1673
    %v1675 = vpop.xlane.xlu0 %1674
    %v1676 = vrcp.pop %v1675
    %v1677 = vmul.f32 %v1673, %v1676
    %1678 = vst [vmem:[#allocation6] sm:$0xff] %v1677
    // Predicated region
    $region46: #{qnetwork_forward.1} parent=1 // pred_check
      _
    $region47: #{qnetwork_forward.1} parent=1 // pred_check_branch
      %1680 = sbr.rel (0) target = $region49
    $region48: #{qnetwork_forward.1} parent=1 // pred_region
      %1682 = vsyncadd [#allocation4], 0
      %s1684 = sshll.u32 [#allocation5], 4
      %s1685 = int_to_ptr.vmem [resolvable:$true] %s1684
      %s1686 = sshll.u32 %s10, 4
      %s1687 = int_to_ptr.hbm [resolvable:$true] %s1686
      %1689 = dma.vmem_to_hbm [thread:$0]  %s1685, 128, %s1687, [#allocation4]
    $region49: #{qnetwork_forward.1} parent=1 // pred_fallthru
      _
    // Predicated region
    $region50: #{qnetwork_forward.1} parent=1 // pred_check
      _
    $region51: #{qnetwork_forward.1} parent=1 // pred_check_branch
      %1691 = sbr.rel (0) target = $region53
    $region52: #{qnetwork_forward.1} parent=1 // pred_region
      %1693 = vsyncadd [#allocation7], 0
      %s1695 = sshll.u32 [#allocation6], 4
      %s1696 = int_to_ptr.vmem [resolvable:$true] %s1695
      %s1697 = sshll.u32 %s11, 4
      %s1698 = int_to_ptr.hbm [resolvable:$true] %s1697
      %1700 = dma.vmem_to_hbm [thread:$0]  %s1696, 128, %s1698, [#allocation7]
    $region53: #{qnetwork_forward.1} parent=1 // pred_fallthru
      _
    // Predicated region
    $region54: #{qnetwork_forward.1} parent=1 // pred_check
      _
    $region55: #{qnetwork_forward.1} parent=1 // pred_check_branch
      %1702 = sbr.rel (0) target = $region57
    $region56: #{qnetwork_forward.1} parent=1 // pred_region
      %1704 = dma.done [#allocation4], 128
    $region57: #{qnetwork_forward.1} parent=1 // pred_fallthru
      _
    // Predicated region
    $region58: #{qnetwork_forward.1} parent=1 // pred_check
      _
    $region59: #{qnetwork_forward.1} parent=1 // pred_check_branch
      %1706 = sbr.rel (0) target = $region61
    $region60: #{qnetwork_forward.1} parent=1 // pred_region
      %1708 = dma.done [#allocation7], 128
    $region61: #{qnetwork_forward.1} parent=1 // pred_fallthru
      _
    %1709 = vsyncpa [#allocation3], 1
    %1710 = vsyncpa [#allocation4], 1
    %1711 = vsyncpa [#allocation7], 1

</llo_original>
